<compile_context>
chip_gen: v7x
topology: tpu7x:2x2x1
jax: 0.10.0
libtpu: 0.0.40
codegen_flags: <defaults>
</compile_context>

<pallas_src>
import math
import jax
import jax.numpy as jnp
from jax.experimental import pallas as pl
from jax.experimental.pallas import tpu as pltpu

# ---------------- small config consistent with the module ----------------
IMG_SIZE   = 16
PATCH_SIZE = 8
IN_CHANS   = 3
EMBED_DIM  = 32
DEPTH      = 2
NUM_HEADS  = 4
MLP_RATIO  = 4.0
LN_EPS     = 1e-6                       # norm_layer = partial(nn.LayerNorm, eps=1e-6)
B          = 2

HEAD_DIM = EMBED_DIM // NUM_HEADS
HIDDEN   = int(EMBED_DIM * MLP_RATIO)
N_PATCH  = (IMG_SIZE // PATCH_SIZE) ** 2
SEQ      = N_PATCH + 1                  # +1 CLS token
NPAT     = B * N_PATCH                  # flat patch rows
NTOK     = NPAT + B                     # token layout: [patch rows | CLS rows]
NEG_INF  = -1e30

# padded per-head token count (power of 2) so all in-kernel index math is
# shifts/ands only (no vector integer div/mod).
TPAD = 1 << (NTOK - 1).bit_length()     # 16
HN   = NUM_HEADS * TPAD                 # 64 flat (head, token) rows
assert N_PATCH & (N_PATCH - 1) == 0 and HEAD_DIM & (HEAD_DIM - 1) == 0
LOG2_NPATCH   = int(math.log2(N_PATCH))
LOG2_TPAD     = int(math.log2(TPAD))
LOG2_HEAD_DIM = int(math.log2(HEAD_DIM))

# ---------------- slab layouts (row offsets, all static) ----------------
P_ROWS           = IN_CHANS * PATCH_SIZE * PATCH_SIZE          # 192
W32_LAYER0       = P_ROWS
W32_LAYER_STRIDE = 4 * EMBED_DIM + HIDDEN                      # wq wk wv wproj wfc2
W32_ROWS         = P_ROWS + DEPTH * W32_LAYER_STRIDE

F_POS, F_CLS, F_PB, F_NG, F_NB = 0, NPAT, NPAT + 1, NPAT + 2, NPAT + 3
F_LAYER0       = 16
F_LAYER_STRIDE = 16                                            # 9 used + pad
F_ROWS         = F_LAYER0 + DEPTH * F_LAYER_STRIDE


# ---------------- in-kernel helpers ----------------
def _gelu_tanh(x):
    # tanh-approximate GELU (EUP tanh); ~1e-3-level deviation from exact erf.
    c = math.sqrt(2.0 / math.pi)
    return 0.5 * x * (1.0 + jnp.tanh(c * (x + 0.044715 * x * x * x)))


def _layernorm(x, g, b):
    mu = jnp.mean(x, axis=-1, keepdims=True)
    var = jnp.mean(jnp.square(x - mu), axis=-1, keepdims=True)
    return (x - mu) * jax.lax.rsqrt(var + LN_EPS) * g + b


def _full_spec(shape):
    zeros = (0,) * len(shape)
    return pl.BlockSpec(shape, lambda i, _z=zeros: _z)


# ---------------- the single fused ViT kernel ----------------
def _vit_kernel(patches_ref, w32_ref, w128_ref, fp_ref, fb1_ref, o_ref):
    F32 = jnp.float32
    BF16 = jnp.bfloat16
    scale = HEAD_DIM ** (-0.5)
    D = EMBED_DIM

    # ---- PatchEmbed (Conv2d k=s=patch == one matmul) + token assembly -------
    tok = jnp.dot(patches_ref[...], w32_ref[0:P_ROWS, :],
                  preferred_element_type=F32) + fp_ref[F_PB:F_PB + 1, :]
    tok = tok + fp_ref[F_POS:F_POS + NPAT, :]                   # + pos_embed[1:]
    cls = jnp.broadcast_to(fp_ref[F_CLS:F_CLS + 1, :], (B, D))  # cls_token + pos[0]
    # layout: [patch rows 0..NPAT-1 | CLS rows NPAT..NTOK-1]; concat offsets 0/8 aligned
    x = jnp.concatenate([tok, cls], axis=0)                     # (NTOK, D) f32

    # ---- loop-invariant selectors / masks (pow2 shift/and math only) --------
    r = jax.lax.broadcasted_iota(jnp.int32, (HN, NTOK), 0)
    t = jax.lax.broadcasted_iota(jnp.int32, (HN, NTOK), 1)
    qtok = r & (TPAD - 1)                                       # token idx of flat row
    sel = jnp.where(qtok == t, 1.0, 0.0).astype(BF16)           # (HN, NTOK) scatter
    qb = jnp.where(qtok < NPAT, qtok >> LOG2_NPATCH, qtok - NPAT)
    kb = jnp.where(t < NPAT, t >> LOG2_NPATCH, t - NPAT)
    bmask = jnp.where((qb == kb) | (qtok >= NTOK), 0.0, NEG_INF)  # (HN, NTOK) f32

    tt = jax.lax.broadcasted_iota(jnp.int32, (NTOK, HN), 0)
    rr = jax.lax.broadcasted_iota(jnp.int32, (NTOK, HN), 1)
    selT = jnp.where((rr & (TPAD - 1)) == tt, 1.0, 0.0).astype(BF16)   # (NTOK, HN) gather

    hr = jax.lax.broadcasted_iota(jnp.int32, (HN, D), 0) >> LOG2_TPAD
    hc = jax.lax.broadcasted_iota(jnp.int32, (HN, D), 1) >> LOG2_HEAD_DIM
    hmask = jnp.where(hr == hc, 1.0, 0.0)                        # (HN, D) head lanes, f32

    # ---- transformer blocks (static unroll) ---------------------------------
    for d in range(DEPTH):
        wb = W32_LAYER0 + d * W32_LAYER_STRIDE
        fb = F_LAYER0 + d * F_LAYER_STRIDE

        # attention residual: x + proj(attn(norm1(x)))  (ls1/drop_path = Identity)
        h1 = _layernorm(x, fp_ref[fb:fb + 1, :], fp_ref[fb + 1:fb + 2, :]).astype(BF16)
        q = (jnp.dot(h1, w32_ref[wb:wb + D, :], preferred_element_type=F32)
             + fp_ref[fb + 2:fb + 3, :]) * scale
        k = (jnp.dot(h1, w32_ref[wb + D:wb + 2 * D, :], preferred_element_type=F32)
             + fp_ref[fb + 3:fb + 4, :])
        v = (jnp.dot(h1, w32_ref[wb + 2 * D:wb + 3 * D, :], preferred_element_type=F32)
             + fp_ref[fb + 4:fb + 5, :])

        # scatter tokens to (head, token) rows and keep only that head's lanes
        qh = jnp.dot(sel, q.astype(BF16), preferred_element_type=F32) * hmask   # (HN, D)
        s = jax.lax.dot_general(qh.astype(BF16), k.astype(BF16),
                                (((1,), (1,)), ((), ())),
                                preferred_element_type=F32) + bmask             # (HN, NTOK)
        s = s - jnp.max(s, axis=-1, keepdims=True)
        p = jnp.exp(s)
        p = p * pl.reciprocal(jnp.sum(p, axis=-1, keepdims=True), approx=True)
        pv = jnp.dot(p.astype(BF16), v.astype(BF16),
                     preferred_element_type=F32) * hmask                        # (HN, D)
        # heads live in disjoint lanes -> selector-matmul gather == concat
        o = jnp.dot(selT, pv.astype(BF16), preferred_element_type=F32)          # (NTOK, D)
        x = x + (jnp.dot(o.astype(BF16), w32_ref[wb + 3 * D:wb + 4 * D, :],
                         preferred_element_type=F32) + fp_ref[fb + 5:fb + 6, :])

        # MLP residual: x + fc2(gelu(fc1(norm2(x))))  (ls2 = Identity)
        h2 = _layernorm(x, fp_ref[fb + 6:fb + 7, :], fp_ref[fb + 7:fb + 8, :]).astype(BF16)
        m = (jnp.dot(h2, w128_ref[d * D:(d + 1) * D, :], preferred_element_type=F32)
             + fb1_ref[d:d + 1, :])
        m = _gelu_tanh(m)
        x = x + (jnp.dot(m.astype(BF16), w32_ref[wb + 4 * D:wb + 4 * D + HIDDEN, :],
                         preferred_element_type=F32) + fp_ref[fb + 8:fb + 9, :])

    # ---- final LayerNorm of the CLS rows only; head = nn.Identity() ---------
    cls_out = x[NPAT:NPAT + B, :]                                # aligned offset 8
    o_ref[...] = _layernorm(cls_out, fp_ref[F_NG:F_NG + 1, :],
                            fp_ref[F_NB:F_NB + 1, :]).astype(o_ref.dtype)


# ---------------- parameters (deterministic synthetic init) ----------------
def init_params(key):
    keys = jax.random.split(key, 8 + 4 * DEPTH)
    ki = iter(keys)

    def tn(shape, std=0.02):
        return jax.random.truncated_normal(next(ki), -2.0, 2.0, shape,
                                           jnp.float32) * std

    params = {}
    # PatchEmbed: Conv2d(in_chans, embed_dim, kernel=stride=patch) as a matmul
    # over flattened (C, ph, pw) patches: weight (C*ph*pw, D).
    w_conv = tn((EMBED_DIM, IN_CHANS, PATCH_SIZE, PATCH_SIZE))
    params["patch_w"] = jnp.transpose(w_conv.reshape(EMBED_DIM, -1))
    params["patch_b"] = jnp.zeros((EMBED_DIM,), jnp.float32)
    params["cls_token"] = jax.random.normal(next(ki), (1, 1, EMBED_DIM),
                                            jnp.float32) * 1e-6
    params["pos_embed"] = tn((1, SEQ, EMBED_DIM))

    blocks = []
    for _ in range(DEPTH):
        blocks.append(dict(
            ln1_g=jnp.ones((EMBED_DIM,), jnp.float32),
            ln1_b=jnp.zeros((EMBED_DIM,), jnp.float32),
            w_qkv=tn((EMBED_DIM, 3 * EMBED_DIM)),
            b_qkv=jnp.zeros((3 * EMBED_DIM,), jnp.float32),      # qkv_bias=True
            w_proj=tn((EMBED_DIM, EMBED_DIM)),
            b_proj=jnp.zeros((EMBED_DIM,), jnp.float32),
            ln2_g=jnp.ones((EMBED_DIM,), jnp.float32),
            ln2_b=jnp.zeros((EMBED_DIM,), jnp.float32),
            w_fc1=tn((EMBED_DIM, HIDDEN)),
            b_fc1=jnp.zeros((HIDDEN,), jnp.float32),
            w_fc2=tn((HIDDEN, EMBED_DIM)),
            b_fc2=jnp.zeros((EMBED_DIM,), jnp.float32),
        ))
    params["blocks"] = blocks
    params["norm_g"] = jnp.ones((EMBED_DIM,), jnp.float32)
    params["norm_b"] = jnp.zeros((EMBED_DIM,), jnp.float32)
    return params


# ---------------- one-time layout packing into contiguous VMEM slabs --------
def pack_params(params):
    D = EMBED_DIM
    blocks = params["blocks"]

    # bf16 matmul weights with D output lanes: patch_w + per layer [wq wk wv wproj wfc2]
    w32_parts = [params["patch_w"]]
    for blk in blocks:
        w32_parts += [blk["w_qkv"][:, 0:D], blk["w_qkv"][:, D:2 * D],
                      blk["w_qkv"][:, 2 * D:3 * D], blk["w_proj"], blk["w_fc2"]]
    w32 = jnp.concatenate(w32_parts, axis=0).astype(jnp.bfloat16)
    assert w32.shape == (W32_ROWS, D)

    # bf16 matmul weights with HIDDEN output lanes: per-layer fc1
    w128 = jnp.concatenate([blk["w_fc1"] for blk in blocks],
                           axis=0).astype(jnp.bfloat16)          # (DEPTH*D, HIDDEN)

    # f32 param slab (lane width D): pos/cls/patch-bias/final-LN + per-layer rows
    row = lambda v: v.reshape(1, D)
    fp_parts = [
        jnp.tile(params["pos_embed"][0, 1:, :], (B, 1)),          # rows 0..NPAT-1
        row(params["cls_token"].reshape(D) + params["pos_embed"][0, 0, :]),
        row(params["patch_b"]),
        row(params["norm_g"]),
        row(params["norm_b"]),
        jnp.zeros((F_LAYER0 - (NPAT + 4), D), jnp.float32),
    ]
    for blk in blocks:
        fp_parts += [row(blk["ln1_g"]), row(blk["ln1_b"]),
                     row(blk["b_qkv"][0:D]), row(blk["b_qkv"][D:2 * D]),
                     row(blk["b_qkv"][2 * D:3 * D]), row(blk["b_proj"]),
                     row(blk["ln2_g"]), row(blk["ln2_b"]), row(blk["b_fc2"]),
                     jnp.zeros((F_LAYER_STRIDE - 9, D), jnp.float32)]
    fp = jnp.concatenate(fp_parts, axis=0)
    assert fp.shape == (F_ROWS, D)

    fb1 = jnp.stack([blk["b_fc1"] for blk in blocks])             # (DEPTH, HIDDEN) f32
    return dict(w32=w32, w128=w128, fp=fp, fb1=fb1)


# ---------------- forward pass (single fused pallas_call) ----------------
def patchify(x_nchw):
    Bb, C, H, W = x_nchw.shape
    ph = pw = PATCH_SIZE
    Ho, Wo = H // ph, W // pw
    x = x_nchw.reshape(Bb, C, Ho, ph, Wo, pw)
    x = jnp.transpose(x, (0, 2, 4, 1, 3, 5))          # (B, Ho, Wo, C, ph, pw)
    return x.reshape(Bb * Ho * Wo, C * ph * pw)


@jax.jit
def dino_vit_forward(packed, x_nchw):
    # npatch == N and w == h -> interpolate_pos_encoding returns pos_embed.
    patches = patchify(x_nchw).astype(jnp.bfloat16)   # (B*P, C*ph*pw)
    args = [patches, packed["w32"], packed["w128"], packed["fp"], packed["fb1"]]
    # Single grid point: everything resident in VMEM (<<1 MiB).  On v7x a
    # batch-parallel grid over the 2 TensorCores would be the next lever.
    return pl.pallas_call(
        _vit_kernel,
        out_shape=jax.ShapeDtypeStruct((B, EMBED_DIM), jnp.float32),
        grid=(1,),
        in_specs=[_full_spec(a.shape) for a in args],
        out_specs=_full_spec((B, EMBED_DIM)),
        compiler_params=pltpu.CompilerParams(dimension_semantics=("arbitrary",)),
    )(*args)


# ---------------- pure-JAX reference (f32, exact GELU) for validation -------
def reference_forward(params, x_nchw):
    patches = patchify(x_nchw)
    tok = (patches @ params["patch_w"] + params["patch_b"]).reshape(B, N_PATCH, EMBED_DIM)
    cls = jnp.broadcast_to(params["cls_token"], (B, 1, EMBED_DIM))
    x = jnp.concatenate([cls, tok], axis=1) + params["pos_embed"]

    def ln(v, g, b):
        mu = v.mean(-1, keepdims=True)
        var = jnp.square(v - mu).mean(-1, keepdims=True)
        return (v - mu) / jnp.sqrt(var + LN_EPS) * g + b

    for blk in params["blocks"]:
        h = ln(x, blk["ln1_g"], blk["ln1_b"])
        qkv = (h @ blk["w_qkv"] + blk["b_qkv"]).reshape(B, SEQ, 3, NUM_HEADS, HEAD_DIM)
        qkv = jnp.transpose(qkv, (2, 0, 3, 1, 4))
        q, k, v = qkv[0] * HEAD_DIM ** (-0.5), qkv[1], qkv[2]
        a = jax.nn.softmax(jnp.einsum("bhqd,bhkd->bhqk", q, k), axis=-1)
        o = jnp.einsum("bhqk,bhkd->bhqd", a, v)
        o = jnp.transpose(o, (0, 2, 1, 3)).reshape(B, SEQ, EMBED_DIM)
        x = x + o @ blk["w_proj"] + blk["b_proj"]
        h = ln(x, blk["ln2_g"], blk["ln2_b"])
        m = h @ blk["w_fc1"] + blk["b_fc1"]
        m = 0.5 * m * (1.0 + jax.scipy.special.erf(m / jnp.sqrt(2.0)))
        x = x + m @ blk["w_fc2"] + blk["b_fc2"]
    return ln(x[:, 0, :], params["norm_g"], params["norm_b"])


if __name__ == "__main__":
    key = jax.random.PRNGKey(0)
    pkey, xkey = jax.random.split(key)
    params = init_params(pkey)
    packed = pack_params(params)
    x = jax.random.normal(xkey, (B, IN_CHANS, IMG_SIZE, IMG_SIZE), jnp.float32)

    out = dino_vit_forward(packed, x)
    out = jax.block_until_ready(out)
    assert out.shape == (B, EMBED_DIM)
    assert bool(jnp.all(jnp.isfinite(out)))

    # loose tolerance: bf16 MXU operands + approx reciprocal + tanh GELU
    ref = reference_forward(params, x)
    assert float(jnp.max(jnp.abs(out - ref))) < 0.15
    print("KERNEL_OK")
</pallas_src>

<mosaic_0001>
module attributes {stable_mosaic.version = 11 : i64} {
  func.func @_vit_kernel(%arg0: i32, %arg1: memref<8x192xbf16, #tpu.memory_space<vmem>>, %arg2: memref<704x32xbf16, #tpu.memory_space<vmem>>, %arg3: memref<64x128xbf16, #tpu.memory_space<vmem>>, %arg4: memref<48x32xf32, #tpu.memory_space<vmem>>, %arg5: memref<2x128xf32, #tpu.memory_space<vmem>>, %arg6: memref<2x32xf32, #tpu.memory_space<vmem>>) attributes {dimension_semantics = [#tpu.dimension_semantics<arbitrary>], iteration_bounds = array<i64: 1>, scalar_prefetch = 0 : i64, scratch_operands = 0 : i64, tpu.core_type = #tpu.core_type<tc>, window_params = [{pipeline_mode = #tpu.pipeline_mode<synchronous>, transform_indices = @transform_0, window_bounds = array<i64: 8, 192>}, {pipeline_mode = #tpu.pipeline_mode<synchronous>, transform_indices = @transform_1, window_bounds = array<i64: 704, 32>}, {pipeline_mode = #tpu.pipeline_mode<synchronous>, transform_indices = @transform_2, window_bounds = array<i64: 64, 128>}, {pipeline_mode = #tpu.pipeline_mode<synchronous>, transform_indices = @transform_3, window_bounds = array<i64: 48, 32>}, {pipeline_mode = #tpu.pipeline_mode<synchronous>, transform_indices = @transform_4, window_bounds = array<i64: 2, 128>}, {pipeline_mode = #tpu.pipeline_mode<synchronous>, transform_indices = @transform_5, window_bounds = array<i64: 2, 32>}]} {
    %c0 = arith.constant 0 : index
    %c0_0 = arith.constant 0 : index
    %0 = vector.load %arg1[%c0, %c0_0] : memref<8x192xbf16, #tpu.memory_space<vmem>>, vector<8x192xbf16>
    %c0_1 = arith.constant 0 : index
    %c0_2 = arith.constant 0 : index
    %1 = vector.load %arg2[%c0_1, %c0_2] : memref<704x32xbf16, #tpu.memory_space<vmem>>, vector<192x32xbf16>
    %cst = arith.constant dense<0.000000e+00> : vector<8x32xf32>
    %2 = tpu.matmul %0, %1, %cst {dimension_numbers = #tpu.dot_dimension_numbers<[1], [0], [0], [1], [0, 0, 1, 1], [], []>} : vector<8x192xbf16>, vector<192x32xbf16>, vector<8x32xf32> -> vector<8x32xf32>
    %c9 = arith.constant 9 : index
    %c0_3 = arith.constant 0 : index
    %3 = vector.load %arg4[%c9, %c0_3] : memref<48x32xf32, #tpu.memory_space<vmem>>, vector<1x32xf32>
    %4 = vector.broadcast %3 : vector<1x32xf32> to vector<8x32xf32>
    %5 = arith.addf %2, %4 : vector<8x32xf32>
    %c0_4 = arith.constant 0 : index
    %c0_5 = arith.constant 0 : index
    %6 = vector.load %arg4[%c0_4, %c0_5] : memref<48x32xf32, #tpu.memory_space<vmem>>, vector<8x32xf32>
    %7 = arith.addf %5, %6 : vector<8x32xf32>
    %c8 = arith.constant 8 : index
    %c0_6 = arith.constant 0 : index
    %8 = vector.load %arg4[%c8, %c0_6] : memref<48x32xf32, #tpu.memory_space<vmem>>, vector<1x32xf32>
    %9 = vector.shape_cast %8 : vector<1x32xf32> to vector<1x32xf32>
    %10 = vector.broadcast %9 : vector<1x32xf32> to vector<2x32xf32>
    %11 = tpu.concatenate %7, %10 in 0 : vector<8x32xf32>, vector<2x32xf32> -> vector<10x32xf32>
    %12 = tpu.iota {dimensions = array<i32: 0>} : vector<64x10xi32>
    %13 = tpu.iota {dimensions = array<i32: 1>} : vector<64x10xi32>
    %c15_i32 = arith.constant 15 : i32
    %14 = vector.broadcast %c15_i32 : i32 to vector<64x10xi32>
    %15 = arith.andi %12, %14 : vector<64x10xi32>
    %16 = arith.cmpi eq, %15, %13 : vector<64x10xi32>
    %cst_7 = arith.constant 1.000000e+00 : f32
    %cst_8 = arith.constant 0.000000e+00 : f32
    %17 = vector.broadcast %cst_7 : f32 to vector<64x10xf32>
    %18 = vector.broadcast %cst_8 : f32 to vector<64x10xf32>
    %19 = arith.select %16, %17, %18 : vector<64x10xi1>, vector<64x10xf32>
    %20 = arith.truncf %19 : vector<64x10xf32> to vector<64x10xbf16>
    %c8_i32 = arith.constant 8 : i32
    %21 = vector.broadcast %c8_i32 : i32 to vector<64x10xi32>
    %22 = arith.cmpi slt, %15, %21 : vector<64x10xi32>
    %c2_i32 = arith.constant 2 : i32
    %23 = vector.broadcast %c2_i32 : i32 to vector<64x10xi32>
    %24 = arith.shrsi %15, %23 : vector<64x10xi32>
    %c8_i32_9 = arith.constant 8 : i32
    %25 = vector.broadcast %c8_i32_9 : i32 to vector<64x10xi32>
    %26 = arith.subi %15, %25 : vector<64x10xi32>
    %27 = arith.select %22, %24, %26 : vector<64x10xi1>, vector<64x10xi32>
    %c8_i32_10 = arith.constant 8 : i32
    %28 = vector.broadcast %c8_i32_10 : i32 to vector<64x10xi32>
    %29 = arith.cmpi slt, %13, %28 : vector<64x10xi32>
    %c2_i32_11 = arith.constant 2 : i32
    %30 = vector.broadcast %c2_i32_11 : i32 to vector<64x10xi32>
    %31 = arith.shrsi %13, %30 : vector<64x10xi32>
    %c8_i32_12 = arith.constant 8 : i32
    %32 = vector.broadcast %c8_i32_12 : i32 to vector<64x10xi32>
    %33 = arith.subi %13, %32 : vector<64x10xi32>
    %34 = arith.select %29, %31, %33 : vector<64x10xi1>, vector<64x10xi32>
    %35 = arith.cmpi eq, %27, %34 : vector<64x10xi32>
    %c10_i32 = arith.constant 10 : i32
    %36 = vector.broadcast %c10_i32 : i32 to vector<64x10xi32>
    %37 = arith.cmpi sge, %15, %36 : vector<64x10xi32>
    %38 = arith.ori %35, %37 : vector<64x10xi1>
    %cst_13 = arith.constant 0.000000e+00 : f32
    %cst_14 = arith.constant -1.000000e+30 : f32
    %39 = vector.broadcast %cst_13 : f32 to vector<64x10xf32>
    %40 = vector.broadcast %cst_14 : f32 to vector<64x10xf32>
    %41 = arith.select %38, %39, %40 : vector<64x10xi1>, vector<64x10xf32>
    %42 = tpu.iota {dimensions = array<i32: 0>} : vector<10x64xi32>
    %43 = tpu.iota {dimensions = array<i32: 1>} : vector<10x64xi32>
    %c15_i32_15 = arith.constant 15 : i32
    %44 = vector.broadcast %c15_i32_15 : i32 to vector<10x64xi32>
    %45 = arith.andi %43, %44 : vector<10x64xi32>
    %46 = arith.cmpi eq, %45, %42 : vector<10x64xi32>
    %cst_16 = arith.constant 1.000000e+00 : f32
    %cst_17 = arith.constant 0.000000e+00 : f32
    %47 = vector.broadcast %cst_16 : f32 to vector<10x64xf32>
    %48 = vector.broadcast %cst_17 : f32 to vector<10x64xf32>
    %49 = arith.select %46, %47, %48 : vector<10x64xi1>, vector<10x64xf32>
    %50 = arith.truncf %49 : vector<10x64xf32> to vector<10x64xbf16>
    %51 = tpu.iota {dimensions = array<i32: 0>} : vector<64x32xi32>
    %c4_i32 = arith.constant 4 : i32
    %52 = vector.broadcast %c4_i32 : i32 to vector<64x32xi32>
    %53 = arith.shrsi %51, %52 : vector<64x32xi32>
    %54 = tpu.iota {dimensions = array<i32: 1>} : vector<64x32xi32>
    %c3_i32 = arith.constant 3 : i32
    %55 = vector.broadcast %c3_i32 : i32 to vector<64x32xi32>
    %56 = arith.shrsi %54, %55 : vector<64x32xi32>
    %57 = arith.cmpi eq, %53, %56 : vector<64x32xi32>
    %cst_18 = arith.constant 1.000000e+00 : f32
    %cst_19 = arith.constant 0.000000e+00 : f32
    %58 = vector.broadcast %cst_18 : f32 to vector<64x32xf32>
    %59 = vector.broadcast %cst_19 : f32 to vector<64x32xf32>
    %60 = arith.select %57, %58, %59 : vector<64x32xi1>, vector<64x32xf32>
    %c16 = arith.constant 16 : index
    %c0_20 = arith.constant 0 : index
    %61 = vector.load %arg4[%c16, %c0_20] : memref<48x32xf32, #tpu.memory_space<vmem>>, vector<1x32xf32>
    %c17 = arith.constant 17 : index
    %c0_21 = arith.constant 0 : index
    %62 = vector.load %arg4[%c17, %c0_21] : memref<48x32xf32, #tpu.memory_space<vmem>>, vector<1x32xf32>
    %cst_22 = arith.constant dense<0.000000e+00> : vector<10xf32>
    %63 = vector.multi_reduction <add>, %11, %cst_22 [1] : vector<10x32xf32> to vector<10xf32>
    %64 = vector.shape_cast %63 : vector<10xf32> to vector<10x1xf32>
    %cst_23 = arith.constant 3.200000e+01 : f32
    %65 = vector.broadcast %cst_23 : f32 to vector<10x1xf32>
    %66 = arith.divf %64, %65 : vector<10x1xf32>
    %67 = vector.broadcast %66 : vector<10x1xf32> to vector<10x32xf32>
    %68 = arith.subf %11, %67 : vector<10x32xf32>
    %69 = arith.mulf %68, %68 : vector<10x32xf32>
    %cst_24 = arith.constant dense<0.000000e+00> : vector<10xf32>
    %70 = vector.multi_reduction <add>, %69, %cst_24 [1] : vector<10x32xf32> to vector<10xf32>
    %71 = vector.shape_cast %70 : vector<10xf32> to vector<10x1xf32>
    %cst_25 = arith.constant 3.200000e+01 : f32
    %72 = vector.broadcast %cst_25 : f32 to vector<10x1xf32>
    %73 = arith.divf %71, %72 : vector<10x1xf32>
    %74 = vector.broadcast %66 : vector<10x1xf32> to vector<10x32xf32>
    %75 = arith.subf %11, %74 : vector<10x32xf32>
    %cst_26 = arith.constant 9.99999997E-7 : f32
    %76 = vector.broadcast %cst_26 : f32 to vector<10x1xf32>
    %77 = arith.addf %73, %76 : vector<10x1xf32>
    %78 = math.rsqrt %77 : vector<10x1xf32>
    %79 = vector.broadcast %78 : vector<10x1xf32> to vector<10x32xf32>
    %80 = arith.mulf %75, %79 : vector<10x32xf32>
    %81 = vector.broadcast %61 : vector<1x32xf32> to vector<10x32xf32>
    %82 = arith.mulf %80, %81 : vector<10x32xf32>
    %83 = vector.broadcast %62 : vector<1x32xf32> to vector<10x32xf32>
    %84 = arith.addf %82, %83 : vector<10x32xf32>
    %85 = arith.truncf %84 : vector<10x32xf32> to vector<10x32xbf16>
    %c192 = arith.constant 192 : index
    %c0_27 = arith.constant 0 : index
    %86 = vector.load %arg2[%c192, %c0_27] : memref<704x32xbf16, #tpu.memory_space<vmem>>, vector<32x32xbf16>
    %cst_28 = arith.constant dense<0.000000e+00> : vector<10x32xf32>
    %87 = tpu.matmul %85, %86, %cst_28 {dimension_numbers = #tpu.dot_dimension_numbers<[1], [0], [0], [1], [0, 0, 1, 1], [], []>} : vector<10x32xbf16>, vector<32x32xbf16>, vector<10x32xf32> -> vector<10x32xf32>
    %c18 = arith.constant 18 : index
    %c0_29 = arith.constant 0 : index
    %88 = vector.load %arg4[%c18, %c0_29] : memref<48x32xf32, #tpu.memory_space<vmem>>, vector<1x32xf32>
    %89 = vector.broadcast %88 : vector<1x32xf32> to vector<10x32xf32>
    %90 = arith.addf %87, %89 : vector<10x32xf32>
    %cst_30 = arith.constant 0.353553385 : f32
    %91 = vector.broadcast %cst_30 : f32 to vector<10x32xf32>
    %92 = arith.mulf %90, %91 : vector<10x32xf32>
    %c224 = arith.constant 224 : index
    %c0_31 = arith.constant 0 : index
    %93 = vector.load %arg2[%c224, %c0_31] : memref<704x32xbf16, #tpu.memory_space<vmem>>, vector<32x32xbf16>
    %cst_32 = arith.constant dense<0.000000e+00> : vector<10x32xf32>
    %94 = tpu.matmul %85, %93, %cst_32 {dimension_numbers = #tpu.dot_dimension_numbers<[1], [0], [0], [1], [0, 0, 1, 1], [], []>} : vector<10x32xbf16>, vector<32x32xbf16>, vector<10x32xf32> -> vector<10x32xf32>
    %c19 = arith.constant 19 : index
    %c0_33 = arith.constant 0 : index
    %95 = vector.load %arg4[%c19, %c0_33] : memref<48x32xf32, #tpu.memory_space<vmem>>, vector<1x32xf32>
    %96 = vector.broadcast %95 : vector<1x32xf32> to vector<10x32xf32>
    %97 = arith.addf %94, %96 : vector<10x32xf32>
    %c256 = arith.constant 256 : index
    %c0_34 = arith.constant 0 : index
    %98 = vector.load %arg2[%c256, %c0_34] : memref<704x32xbf16, #tpu.memory_space<vmem>>, vector<32x32xbf16>
    %cst_35 = arith.constant dense<0.000000e+00> : vector<10x32xf32>
    %99 = tpu.matmul %85, %98, %cst_35 {dimension_numbers = #tpu.dot_dimension_numbers<[1], [0], [0], [1], [0, 0, 1, 1], [], []>} : vector<10x32xbf16>, vector<32x32xbf16>, vector<10x32xf32> -> vector<10x32xf32>
    %c20 = arith.constant 20 : index
    %c0_36 = arith.constant 0 : index
    %100 = vector.load %arg4[%c20, %c0_36] : memref<48x32xf32, #tpu.memory_space<vmem>>, vector<1x32xf32>
    %101 = vector.broadcast %100 : vector<1x32xf32> to vector<10x32xf32>
    %102 = arith.addf %99, %101 : vector<10x32xf32>
    %103 = arith.truncf %92 : vector<10x32xf32> to vector<10x32xbf16>
    %cst_37 = arith.constant dense<0.000000e+00> : vector<64x32xf32>
    %104 = tpu.matmul %20, %103, %cst_37 {dimension_numbers = #tpu.dot_dimension_numbers<[1], [0], [0], [1], [0, 0, 1, 1], [], []>} : vector<64x10xbf16>, vector<10x32xbf16>, vector<64x32xf32> -> vector<64x32xf32>
    %105 = arith.mulf %104, %60 : vector<64x32xf32>
    %106 = arith.truncf %105 : vector<64x32xf32> to vector<64x32xbf16>
    %107 = arith.truncf %97 : vector<10x32xf32> to vector<10x32xbf16>
    %cst_38 = arith.constant dense<0.000000e+00> : vector<64x10xf32>
    %108 = tpu.matmul %106, %107, %cst_38 {dimension_numbers = #tpu.dot_dimension_numbers<[1], [1], [0], [0], [0, 0, 1, 0], [], []>} : vector<64x32xbf16>, vector<10x32xbf16>, vector<64x10xf32> -> vector<64x10xf32>
    %109 = arith.addf %108, %41 : vector<64x10xf32>
    %cst_39 = arith.constant dense<0xFF800000> : vector<64xf32>
    %110 = vector.multi_reduction <maximumf>, %109, %cst_39 [1] : vector<64x10xf32> to vector<64xf32>
    %111 = vector.shape_cast %110 : vector<64xf32> to vector<64x1xf32>
    %112 = vector.broadcast %111 : vector<64x1xf32> to vector<64x10xf32>
    %113 = arith.subf %109, %112 : vector<64x10xf32>
    %114 = math.exp %113 : vector<64x10xf32>
    %cst_40 = arith.constant dense<0.000000e+00> : vector<64xf32>
    %115 = vector.multi_reduction <add>, %114, %cst_40 [1] : vector<64x10xf32> to vector<64xf32>
    %116 = vector.shape_cast %115 : vector<64xf32> to vector<64x1xf32>
    %117 = tpu.reciprocal %116 {approx = true} : vector<64x1xf32> -> vector<64x1xf32>
    %118 = vector.broadcast %117 : vector<64x1xf32> to vector<64x10xf32>
    %119 = arith.mulf %114, %118 : vector<64x10xf32>
    %120 = arith.truncf %119 : vector<64x10xf32> to vector<64x10xbf16>
    %121 = arith.truncf %102 : vector<10x32xf32> to vector<10x32xbf16>
    %cst_41 = arith.constant dense<0.000000e+00> : vector<64x32xf32>
    %122 = tpu.matmul %120, %121, %cst_41 {dimension_numbers = #tpu.dot_dimension_numbers<[1], [0], [0], [1], [0, 0, 1, 1], [], []>} : vector<64x10xbf16>, vector<10x32xbf16>, vector<64x32xf32> -> vector<64x32xf32>
    %123 = arith.mulf %122, %60 : vector<64x32xf32>
    %124 = arith.truncf %123 : vector<64x32xf32> to vector<64x32xbf16>
    %cst_42 = arith.constant dense<0.000000e+00> : vector<10x32xf32>
    %125 = tpu.matmul %50, %124, %cst_42 {dimension_numbers = #tpu.dot_dimension_numbers<[1], [0], [0], [1], [0, 0, 1, 1], [], []>} : vector<10x64xbf16>, vector<64x32xbf16>, vector<10x32xf32> -> vector<10x32xf32>
    %126 = arith.truncf %125 : vector<10x32xf32> to vector<10x32xbf16>
    %c288 = arith.constant 288 : index
    %c0_43 = arith.constant 0 : index
    %127 = vector.load %arg2[%c288, %c0_43] : memref<704x32xbf16, #tpu.memory_space<vmem>>, vector<32x32xbf16>
    %cst_44 = arith.constant dense<0.000000e+00> : vector<10x32xf32>
    %128 = tpu.matmul %126, %127, %cst_44 {dimension_numbers = #tpu.dot_dimension_numbers<[1], [0], [0], [1], [0, 0, 1, 1], [], []>} : vector<10x32xbf16>, vector<32x32xbf16>, vector<10x32xf32> -> vector<10x32xf32>
    %c21 = arith.constant 21 : index
    %c0_45 = arith.constant 0 : index
    %129 = vector.load %arg4[%c21, %c0_45] : memref<48x32xf32, #tpu.memory_space<vmem>>, vector<1x32xf32>
    %130 = vector.broadcast %129 : vector<1x32xf32> to vector<10x32xf32>
    %131 = arith.addf %128, %130 : vector<10x32xf32>
    %132 = arith.addf %11, %131 : vector<10x32xf32>
    %c22 = arith.constant 22 : index
    %c0_46 = arith.constant 0 : index
    %133 = vector.load %arg4[%c22, %c0_46] : memref<48x32xf32, #tpu.memory_space<vmem>>, vector<1x32xf32>
    %c23 = arith.constant 23 : index
    %c0_47 = arith.constant 0 : index
    %134 = vector.load %arg4[%c23, %c0_47] : memref<48x32xf32, #tpu.memory_space<vmem>>, vector<1x32xf32>
    %cst_48 = arith.constant dense<0.000000e+00> : vector<10xf32>
    %135 = vector.multi_reduction <add>, %132, %cst_48 [1] : vector<10x32xf32> to vector<10xf32>
    %136 = vector.shape_cast %135 : vector<10xf32> to vector<10x1xf32>
    %cst_49 = arith.constant 3.200000e+01 : f32
    %137 = vector.broadcast %cst_49 : f32 to vector<10x1xf32>
    %138 = arith.divf %136, %137 : vector<10x1xf32>
    %139 = vector.broadcast %138 : vector<10x1xf32> to vector<10x32xf32>
    %140 = arith.subf %132, %139 : vector<10x32xf32>
    %141 = arith.mulf %140, %140 : vector<10x32xf32>
    %cst_50 = arith.constant dense<0.000000e+00> : vector<10xf32>
    %142 = vector.multi_reduction <add>, %141, %cst_50 [1] : vector<10x32xf32> to vector<10xf32>
    %143 = vector.shape_cast %142 : vector<10xf32> to vector<10x1xf32>
    %cst_51 = arith.constant 3.200000e+01 : f32
    %144 = vector.broadcast %cst_51 : f32 to vector<10x1xf32>
    %145 = arith.divf %143, %144 : vector<10x1xf32>
    %146 = vector.broadcast %138 : vector<10x1xf32> to vector<10x32xf32>
    %147 = arith.subf %132, %146 : vector<10x32xf32>
    %cst_52 = arith.constant 9.99999997E-7 : f32
    %148 = vector.broadcast %cst_52 : f32 to vector<10x1xf32>
    %149 = arith.addf %145, %148 : vector<10x1xf32>
    %150 = math.rsqrt %149 : vector<10x1xf32>
    %151 = vector.broadcast %150 : vector<10x1xf32> to vector<10x32xf32>
    %152 = arith.mulf %147, %151 : vector<10x32xf32>
    %153 = vector.broadcast %133 : vector<1x32xf32> to vector<10x32xf32>
    %154 = arith.mulf %152, %153 : vector<10x32xf32>
    %155 = vector.broadcast %134 : vector<1x32xf32> to vector<10x32xf32>
    %156 = arith.addf %154, %155 : vector<10x32xf32>
    %157 = arith.truncf %156 : vector<10x32xf32> to vector<10x32xbf16>
    %c0_53 = arith.constant 0 : index
    %c0_54 = arith.constant 0 : index
    %158 = vector.load %arg3[%c0_53, %c0_54] : memref<64x128xbf16, #tpu.memory_space<vmem>>, vector<32x128xbf16>
    %cst_55 = arith.constant dense<0.000000e+00> : vector<10x128xf32>
    %159 = tpu.matmul %157, %158, %cst_55 {dimension_numbers = #tpu.dot_dimension_numbers<[1], [0], [0], [1], [0, 0, 1, 1], [], []>} : vector<10x32xbf16>, vector<32x128xbf16>, vector<10x128xf32> -> vector<10x128xf32>
    %c0_56 = arith.constant 0 : index
    %c0_57 = arith.constant 0 : index
    %160 = vector.load %arg5[%c0_56, %c0_57] : memref<2x128xf32, #tpu.memory_space<vmem>>, vector<1x128xf32>
    %161 = vector.broadcast %160 : vector<1x128xf32> to vector<10x128xf32>
    %162 = arith.addf %159, %161 : vector<10x128xf32>
    %cst_58 = arith.constant 5.000000e-01 : f32
    %163 = vector.broadcast %cst_58 : f32 to vector<10x128xf32>
    %164 = arith.mulf %163, %162 : vector<10x128xf32>
    %cst_59 = arith.constant 4.471500e-02 : f32
    %165 = vector.broadcast %cst_59 : f32 to vector<10x128xf32>
    %166 = arith.mulf %165, %162 : vector<10x128xf32>
    %167 = arith.mulf %166, %162 : vector<10x128xf32>
    %168 = arith.mulf %167, %162 : vector<10x128xf32>
    %169 = arith.addf %162, %168 : vector<10x128xf32>
    %cst_60 = arith.constant 0.797884583 : f32
    %170 = vector.broadcast %cst_60 : f32 to vector<10x128xf32>
    %171 = arith.mulf %170, %169 : vector<10x128xf32>
    %172 = math.tanh %171 : vector<10x128xf32>
    %cst_61 = arith.constant 1.000000e+00 : f32
    %173 = vector.broadcast %cst_61 : f32 to vector<10x128xf32>
    %174 = arith.addf %173, %172 : vector<10x128xf32>
    %175 = arith.mulf %164, %174 : vector<10x128xf32>
    %176 = arith.truncf %175 : vector<10x128xf32> to vector<10x128xbf16>
    %c320 = arith.constant 320 : index
    %c0_62 = arith.constant 0 : index
    %177 = vector.load %arg2[%c320, %c0_62] : memref<704x32xbf16, #tpu.memory_space<vmem>>, vector<128x32xbf16>
    %cst_63 = arith.constant dense<0.000000e+00> : vector<10x32xf32>
    %178 = tpu.matmul %176, %177, %cst_63 {dimension_numbers = #tpu.dot_dimension_numbers<[1], [0], [0], [1], [0, 0, 1, 1], [], []>} : vector<10x128xbf16>, vector<128x32xbf16>, vector<10x32xf32> -> vector<10x32xf32>
    %c24 = arith.constant 24 : index
    %c0_64 = arith.constant 0 : index
    %179 = vector.load %arg4[%c24, %c0_64] : memref<48x32xf32, #tpu.memory_space<vmem>>, vector<1x32xf32>
    %180 = vector.broadcast %179 : vector<1x32xf32> to vector<10x32xf32>
    %181 = arith.addf %178, %180 : vector<10x32xf32>
    %182 = arith.addf %132, %181 : vector<10x32xf32>
    %c32 = arith.constant 32 : index
    %c0_65 = arith.constant 0 : index
    %183 = vector.load %arg4[%c32, %c0_65] : memref<48x32xf32, #tpu.memory_space<vmem>>, vector<1x32xf32>
    %c33 = arith.constant 33 : index
    %c0_66 = arith.constant 0 : index
    %184 = vector.load %arg4[%c33, %c0_66] : memref<48x32xf32, #tpu.memory_space<vmem>>, vector<1x32xf32>
    %cst_67 = arith.constant dense<0.000000e+00> : vector<10xf32>
    %185 = vector.multi_reduction <add>, %182, %cst_67 [1] : vector<10x32xf32> to vector<10xf32>
    %186 = vector.shape_cast %185 : vector<10xf32> to vector<10x1xf32>
    %cst_68 = arith.constant 3.200000e+01 : f32
    %187 = vector.broadcast %cst_68 : f32 to vector<10x1xf32>
    %188 = arith.divf %186, %187 : vector<10x1xf32>
    %189 = vector.broadcast %188 : vector<10x1xf32> to vector<10x32xf32>
    %190 = arith.subf %182, %189 : vector<10x32xf32>
    %191 = arith.mulf %190, %190 : vector<10x32xf32>
    %cst_69 = arith.constant dense<0.000000e+00> : vector<10xf32>
    %192 = vector.multi_reduction <add>, %191, %cst_69 [1] : vector<10x32xf32> to vector<10xf32>
    %193 = vector.shape_cast %192 : vector<10xf32> to vector<10x1xf32>
    %cst_70 = arith.constant 3.200000e+01 : f32
    %194 = vector.broadcast %cst_70 : f32 to vector<10x1xf32>
    %195 = arith.divf %193, %194 : vector<10x1xf32>
    %196 = vector.broadcast %188 : vector<10x1xf32> to vector<10x32xf32>
    %197 = arith.subf %182, %196 : vector<10x32xf32>
    %cst_71 = arith.constant 9.99999997E-7 : f32
    %198 = vector.broadcast %cst_71 : f32 to vector<10x1xf32>
    %199 = arith.addf %195, %198 : vector<10x1xf32>
    %200 = math.rsqrt %199 : vector<10x1xf32>
    %201 = vector.broadcast %200 : vector<10x1xf32> to vector<10x32xf32>
    %202 = arith.mulf %197, %201 : vector<10x32xf32>
    %203 = vector.broadcast %183 : vector<1x32xf32> to vector<10x32xf32>
    %204 = arith.mulf %202, %203 : vector<10x32xf32>
    %205 = vector.broadcast %184 : vector<1x32xf32> to vector<10x32xf32>
    %206 = arith.addf %204, %205 : vector<10x32xf32>
    %207 = arith.truncf %206 : vector<10x32xf32> to vector<10x32xbf16>
    %c448 = arith.constant 448 : index
    %c0_72 = arith.constant 0 : index
    %208 = vector.load %arg2[%c448, %c0_72] : memref<704x32xbf16, #tpu.memory_space<vmem>>, vector<32x32xbf16>
    %cst_73 = arith.constant dense<0.000000e+00> : vector<10x32xf32>
    %209 = tpu.matmul %207, %208, %cst_73 {dimension_numbers = #tpu.dot_dimension_numbers<[1], [0], [0], [1], [0, 0, 1, 1], [], []>} : vector<10x32xbf16>, vector<32x32xbf16>, vector<10x32xf32> -> vector<10x32xf32>
    %c34 = arith.constant 34 : index
    %c0_74 = arith.constant 0 : index
    %210 = vector.load %arg4[%c34, %c0_74] : memref<48x32xf32, #tpu.memory_space<vmem>>, vector<1x32xf32>
    %211 = vector.broadcast %210 : vector<1x32xf32> to vector<10x32xf32>
    %212 = arith.addf %209, %211 : vector<10x32xf32>
    %cst_75 = arith.constant 0.353553385 : f32
    %213 = vector.broadcast %cst_75 : f32 to vector<10x32xf32>
    %214 = arith.mulf %212, %213 : vector<10x32xf32>
    %c480 = arith.constant 480 : index
    %c0_76 = arith.constant 0 : index
    %215 = vector.load %arg2[%c480, %c0_76] : memref<704x32xbf16, #tpu.memory_space<vmem>>, vector<32x32xbf16>
    %cst_77 = arith.constant dense<0.000000e+00> : vector<10x32xf32>
    %216 = tpu.matmul %207, %215, %cst_77 {dimension_numbers = #tpu.dot_dimension_numbers<[1], [0], [0], [1], [0, 0, 1, 1], [], []>} : vector<10x32xbf16>, vector<32x32xbf16>, vector<10x32xf32> -> vector<10x32xf32>
    %c35 = arith.constant 35 : index
    %c0_78 = arith.constant 0 : index
    %217 = vector.load %arg4[%c35, %c0_78] : memref<48x32xf32, #tpu.memory_space<vmem>>, vector<1x32xf32>
    %218 = vector.broadcast %217 : vector<1x32xf32> to vector<10x32xf32>
    %219 = arith.addf %216, %218 : vector<10x32xf32>
    %c512 = arith.constant 512 : index
    %c0_79 = arith.constant 0 : index
    %220 = vector.load %arg2[%c512, %c0_79] : memref<704x32xbf16, #tpu.memory_space<vmem>>, vector<32x32xbf16>
    %cst_80 = arith.constant dense<0.000000e+00> : vector<10x32xf32>
    %221 = tpu.matmul %207, %220, %cst_80 {dimension_numbers = #tpu.dot_dimension_numbers<[1], [0], [0], [1], [0, 0, 1, 1], [], []>} : vector<10x32xbf16>, vector<32x32xbf16>, vector<10x32xf32> -> vector<10x32xf32>
    %c36 = arith.constant 36 : index
    %c0_81 = arith.constant 0 : index
    %222 = vector.load %arg4[%c36, %c0_81] : memref<48x32xf32, #tpu.memory_space<vmem>>, vector<1x32xf32>
    %223 = vector.broadcast %222 : vector<1x32xf32> to vector<10x32xf32>
    %224 = arith.addf %221, %223 : vector<10x32xf32>
    %225 = arith.truncf %214 : vector<10x32xf32> to vector<10x32xbf16>
    %cst_82 = arith.constant dense<0.000000e+00> : vector<64x32xf32>
    %226 = tpu.matmul %20, %225, %cst_82 {dimension_numbers = #tpu.dot_dimension_numbers<[1], [0], [0], [1], [0, 0, 1, 1], [], []>} : vector<64x10xbf16>, vector<10x32xbf16>, vector<64x32xf32> -> vector<64x32xf32>
    %227 = arith.mulf %226, %60 : vector<64x32xf32>
    %228 = arith.truncf %227 : vector<64x32xf32> to vector<64x32xbf16>
    %229 = arith.truncf %219 : vector<10x32xf32> to vector<10x32xbf16>
    %cst_83 = arith.constant dense<0.000000e+00> : vector<64x10xf32>
    %230 = tpu.matmul %228, %229, %cst_83 {dimension_numbers = #tpu.dot_dimension_numbers<[1], [1], [0], [0], [0, 0, 1, 0], [], []>} : vector<64x32xbf16>, vector<10x32xbf16>, vector<64x10xf32> -> vector<64x10xf32>
    %231 = arith.addf %230, %41 : vector<64x10xf32>
    %cst_84 = arith.constant dense<0xFF800000> : vector<64xf32>
    %232 = vector.multi_reduction <maximumf>, %231, %cst_84 [1] : vector<64x10xf32> to vector<64xf32>
    %233 = vector.shape_cast %232 : vector<64xf32> to vector<64x1xf32>
    %234 = vector.broadcast %233 : vector<64x1xf32> to vector<64x10xf32>
    %235 = arith.subf %231, %234 : vector<64x10xf32>
    %236 = math.exp %235 : vector<64x10xf32>
    %cst_85 = arith.constant dense<0.000000e+00> : vector<64xf32>
    %237 = vector.multi_reduction <add>, %236, %cst_85 [1] : vector<64x10xf32> to vector<64xf32>
    %238 = vector.shape_cast %237 : vector<64xf32> to vector<64x1xf32>
    %239 = tpu.reciprocal %238 {approx = true} : vector<64x1xf32> -> vector<64x1xf32>
    %240 = vector.broadcast %239 : vector<64x1xf32> to vector<64x10xf32>
    %241 = arith.mulf %236, %240 : vector<64x10xf32>
    %242 = arith.truncf %241 : vector<64x10xf32> to vector<64x10xbf16>
    %243 = arith.truncf %224 : vector<10x32xf32> to vector<10x32xbf16>
    %cst_86 = arith.constant dense<0.000000e+00> : vector<64x32xf32>
    %244 = tpu.matmul %242, %243, %cst_86 {dimension_numbers = #tpu.dot_dimension_numbers<[1], [0], [0], [1], [0, 0, 1, 1], [], []>} : vector<64x10xbf16>, vector<10x32xbf16>, vector<64x32xf32> -> vector<64x32xf32>
    %245 = arith.mulf %244, %60 : vector<64x32xf32>
    %246 = arith.truncf %245 : vector<64x32xf32> to vector<64x32xbf16>
    %cst_87 = arith.constant dense<0.000000e+00> : vector<10x32xf32>
    %247 = tpu.matmul %50, %246, %cst_87 {dimension_numbers = #tpu.dot_dimension_numbers<[1], [0], [0], [1], [0, 0, 1, 1], [], []>} : vector<10x64xbf16>, vector<64x32xbf16>, vector<10x32xf32> -> vector<10x32xf32>
    %248 = arith.truncf %247 : vector<10x32xf32> to vector<10x32xbf16>
    %c544 = arith.constant 544 : index
    %c0_88 = arith.constant 0 : index
    %249 = vector.load %arg2[%c544, %c0_88] : memref<704x32xbf16, #tpu.memory_space<vmem>>, vector<32x32xbf16>
    %cst_89 = arith.constant dense<0.000000e+00> : vector<10x32xf32>
    %250 = tpu.matmul %248, %249, %cst_89 {dimension_numbers = #tpu.dot_dimension_numbers<[1], [0], [0], [1], [0, 0, 1, 1], [], []>} : vector<10x32xbf16>, vector<32x32xbf16>, vector<10x32xf32> -> vector<10x32xf32>
    %c37 = arith.constant 37 : index
    %c0_90 = arith.constant 0 : index
    %251 = vector.load %arg4[%c37, %c0_90] : memref<48x32xf32, #tpu.memory_space<vmem>>, vector<1x32xf32>
    %252 = vector.broadcast %251 : vector<1x32xf32> to vector<10x32xf32>
    %253 = arith.addf %250, %252 : vector<10x32xf32>
    %254 = arith.addf %182, %253 : vector<10x32xf32>
    %c38 = arith.constant 38 : index
    %c0_91 = arith.constant 0 : index
    %255 = vector.load %arg4[%c38, %c0_91] : memref<48x32xf32, #tpu.memory_space<vmem>>, vector<1x32xf32>
    %c39 = arith.constant 39 : index
    %c0_92 = arith.constant 0 : index
    %256 = vector.load %arg4[%c39, %c0_92] : memref<48x32xf32, #tpu.memory_space<vmem>>, vector<1x32xf32>
    %cst_93 = arith.constant dense<0.000000e+00> : vector<10xf32>
    %257 = vector.multi_reduction <add>, %254, %cst_93 [1] : vector<10x32xf32> to vector<10xf32>
    %258 = vector.shape_cast %257 : vector<10xf32> to vector<10x1xf32>
    %cst_94 = arith.constant 3.200000e+01 : f32
    %259 = vector.broadcast %cst_94 : f32 to vector<10x1xf32>
    %260 = arith.divf %258, %259 : vector<10x1xf32>
    %261 = vector.broadcast %260 : vector<10x1xf32> to vector<10x32xf32>
    %262 = arith.subf %254, %261 : vector<10x32xf32>
    %263 = arith.mulf %262, %262 : vector<10x32xf32>
    %cst_95 = arith.constant dense<0.000000e+00> : vector<10xf32>
    %264 = vector.multi_reduction <add>, %263, %cst_95 [1] : vector<10x32xf32> to vector<10xf32>
    %265 = vector.shape_cast %264 : vector<10xf32> to vector<10x1xf32>
    %cst_96 = arith.constant 3.200000e+01 : f32
    %266 = vector.broadcast %cst_96 : f32 to vector<10x1xf32>
    %267 = arith.divf %265, %266 : vector<10x1xf32>
    %268 = vector.broadcast %260 : vector<10x1xf32> to vector<10x32xf32>
    %269 = arith.subf %254, %268 : vector<10x32xf32>
    %cst_97 = arith.constant 9.99999997E-7 : f32
    %270 = vector.broadcast %cst_97 : f32 to vector<10x1xf32>
    %271 = arith.addf %267, %270 : vector<10x1xf32>
    %272 = math.rsqrt %271 : vector<10x1xf32>
    %273 = vector.broadcast %272 : vector<10x1xf32> to vector<10x32xf32>
    %274 = arith.mulf %269, %273 : vector<10x32xf32>
    %275 = vector.broadcast %255 : vector<1x32xf32> to vector<10x32xf32>
    %276 = arith.mulf %274, %275 : vector<10x32xf32>
    %277 = vector.broadcast %256 : vector<1x32xf32> to vector<10x32xf32>
    %278 = arith.addf %276, %277 : vector<10x32xf32>
    %279 = arith.truncf %278 : vector<10x32xf32> to vector<10x32xbf16>
    %c32_98 = arith.constant 32 : index
    %c0_99 = arith.constant 0 : index
    %280 = vector.load %arg3[%c32_98, %c0_99] : memref<64x128xbf16, #tpu.memory_space<vmem>>, vector<32x128xbf16>
    %cst_100 = arith.constant dense<0.000000e+00> : vector<10x128xf32>
    %281 = tpu.matmul %279, %280, %cst_100 {dimension_numbers = #tpu.dot_dimension_numbers<[1], [0], [0], [1], [0, 0, 1, 1], [], []>} : vector<10x32xbf16>, vector<32x128xbf16>, vector<10x128xf32> -> vector<10x128xf32>
    %c1 = arith.constant 1 : index
    %c0_101 = arith.constant 0 : index
    %282 = vector.load %arg5[%c1, %c0_101] : memref<2x128xf32, #tpu.memory_space<vmem>>, vector<1x128xf32>
    %283 = vector.broadcast %282 : vector<1x128xf32> to vector<10x128xf32>
    %284 = arith.addf %281, %283 : vector<10x128xf32>
    %cst_102 = arith.constant 5.000000e-01 : f32
    %285 = vector.broadcast %cst_102 : f32 to vector<10x128xf32>
    %286 = arith.mulf %285, %284 : vector<10x128xf32>
    %cst_103 = arith.constant 4.471500e-02 : f32
    %287 = vector.broadcast %cst_103 : f32 to vector<10x128xf32>
    %288 = arith.mulf %287, %284 : vector<10x128xf32>
    %289 = arith.mulf %288, %284 : vector<10x128xf32>
    %290 = arith.mulf %289, %284 : vector<10x128xf32>
    %291 = arith.addf %284, %290 : vector<10x128xf32>
    %cst_104 = arith.constant 0.797884583 : f32
    %292 = vector.broadcast %cst_104 : f32 to vector<10x128xf32>
    %293 = arith.mulf %292, %291 : vector<10x128xf32>
    %294 = math.tanh %293 : vector<10x128xf32>
    %cst_105 = arith.constant 1.000000e+00 : f32
    %295 = vector.broadcast %cst_105 : f32 to vector<10x128xf32>
    %296 = arith.addf %295, %294 : vector<10x128xf32>
    %297 = arith.mulf %286, %296 : vector<10x128xf32>
    %298 = arith.truncf %297 : vector<10x128xf32> to vector<10x128xbf16>
    %c576 = arith.constant 576 : index
    %c0_106 = arith.constant 0 : index
    %299 = vector.load %arg2[%c576, %c0_106] : memref<704x32xbf16, #tpu.memory_space<vmem>>, vector<128x32xbf16>
    %cst_107 = arith.constant dense<0.000000e+00> : vector<10x32xf32>
    %300 = tpu.matmul %298, %299, %cst_107 {dimension_numbers = #tpu.dot_dimension_numbers<[1], [0], [0], [1], [0, 0, 1, 1], [], []>} : vector<10x128xbf16>, vector<128x32xbf16>, vector<10x32xf32> -> vector<10x32xf32>
    %c40 = arith.constant 40 : index
    %c0_108 = arith.constant 0 : index
    %301 = vector.load %arg4[%c40, %c0_108] : memref<48x32xf32, #tpu.memory_space<vmem>>, vector<1x32xf32>
    %302 = vector.broadcast %301 : vector<1x32xf32> to vector<10x32xf32>
    %303 = arith.addf %300, %302 : vector<10x32xf32>
    %304 = arith.addf %254, %303 : vector<10x32xf32>
    %305 = vector.extract_strided_slice %304 {offsets = [8, 0], sizes = [2, 32], strides = [1, 1]} : vector<10x32xf32> to vector<2x32xf32>
    %c10 = arith.constant 10 : index
    %c0_109 = arith.constant 0 : index
    %306 = vector.load %arg4[%c10, %c0_109] : memref<48x32xf32, #tpu.memory_space<vmem>>, vector<1x32xf32>
    %c11 = arith.constant 11 : index
    %c0_110 = arith.constant 0 : index
    %307 = vector.load %arg4[%c11, %c0_110] : memref<48x32xf32, #tpu.memory_space<vmem>>, vector<1x32xf32>
    %cst_111 = arith.constant dense<0.000000e+00> : vector<2xf32>
    %308 = vector.multi_reduction <add>, %305, %cst_111 [1] : vector<2x32xf32> to vector<2xf32>
    %309 = vector.shape_cast %308 : vector<2xf32> to vector<2x1xf32>
    %cst_112 = arith.constant 3.200000e+01 : f32
    %310 = vector.broadcast %cst_112 : f32 to vector<2x1xf32>
    %311 = arith.divf %309, %310 : vector<2x1xf32>
    %312 = vector.broadcast %311 : vector<2x1xf32> to vector<2x32xf32>
    %313 = arith.subf %305, %312 : vector<2x32xf32>
    %314 = arith.mulf %313, %313 : vector<2x32xf32>
    %cst_113 = arith.constant dense<0.000000e+00> : vector<2xf32>
    %315 = vector.multi_reduction <add>, %314, %cst_113 [1] : vector<2x32xf32> to vector<2xf32>
    %316 = vector.shape_cast %315 : vector<2xf32> to vector<2x1xf32>
    %cst_114 = arith.constant 3.200000e+01 : f32
    %317 = vector.broadcast %cst_114 : f32 to vector<2x1xf32>
    %318 = arith.divf %316, %317 : vector<2x1xf32>
    %319 = vector.broadcast %311 : vector<2x1xf32> to vector<2x32xf32>
    %320 = arith.subf %305, %319 : vector<2x32xf32>
    %cst_115 = arith.constant 9.99999997E-7 : f32
    %321 = vector.broadcast %cst_115 : f32 to vector<2x1xf32>
    %322 = arith.addf %318, %321 : vector<2x1xf32>
    %323 = math.rsqrt %322 : vector<2x1xf32>
    %324 = vector.broadcast %323 : vector<2x1xf32> to vector<2x32xf32>
    %325 = arith.mulf %320, %324 : vector<2x32xf32>
    %326 = vector.broadcast %306 : vector<1x32xf32> to vector<2x32xf32>
    %327 = arith.mulf %325, %326 : vector<2x32xf32>
    %328 = vector.broadcast %307 : vector<1x32xf32> to vector<2x32xf32>
    %329 = arith.addf %327, %328 : vector<2x32xf32>
    %c0_116 = arith.constant 0 : index
    %c0_117 = arith.constant 0 : index
    %330 = vector.load %arg6[%c0_116, %c0_117] : memref<2x32xf32, #tpu.memory_space<vmem>>, vector<2x32xf32>
    tpu.vector_store %arg6[%c0_116, %c0_117], %329 {strides = array<i32>} : memref<2x32xf32, #tpu.memory_space<vmem>>, vector<2x32xf32>,
    return
  }
  func.func @transform_0(%arg0: i32) -> (i32, i32) {
    %c0_i32 = arith.constant 0 : i32
    %c0_i32_0 = arith.constant 0 : i32
    %c0_i32_1 = arith.constant 0 : i32
    return %c0_i32, %c0_i32_0 : i32, i32
  }
  func.func @transform_1(%arg0: i32) -> (i32, i32) {
    %c0_i32 = arith.constant 0 : i32
    %c0_i32_0 = arith.constant 0 : i32
    %c0_i32_1 = arith.constant 0 : i32
    return %c0_i32, %c0_i32_0 : i32, i32
  }
  func.func @transform_2(%arg0: i32) -> (i32, i32) {
    %c0_i32 = arith.constant 0 : i32
    %c0_i32_0 = arith.constant 0 : i32
    %c0_i32_1 = arith.constant 0 : i32
    return %c0_i32, %c0_i32_0 : i32, i32
  }
  func.func @transform_3(%arg0: i32) -> (i32, i32) {
    %c0_i32 = arith.constant 0 : i32
    %c0_i32_0 = arith.constant 0 : i32
    %c0_i32_1 = arith.constant 0 : i32
    return %c0_i32, %c0_i32_0 : i32, i32
  }
  func.func @transform_4(%arg0: i32) -> (i32, i32) {
    %c0_i32 = arith.constant 0 : i32
    %c0_i32_0 = arith.constant 0 : i32
    %c0_i32_1 = arith.constant 0 : i32
    return %c0_i32, %c0_i32_0 : i32, i32
  }
  func.func @transform_5(%arg0: i32) -> (i32, i32) {
    %c0_i32 = arith.constant 0 : i32
    %c0_i32_0 = arith.constant 0 : i32
    %c0_i32_1 = arith.constant 0 : i32
    return %c0_i32, %c0_i32_0 : i32, i32
  }
}

</mosaic_0001>

<llo_original>
// kernel: dino_vit_forward.1
$region0: #{dino_vit_forward.1}
  #allocation0 [shape = 'u32[]', space=smem, size = 0x4, offset = 0x4, fixed_abs, tag = 'smem constant byte address 0x4 - core index']
  #allocation1 [shape = 'u32[144,128]{1,0:T(1,128)}', space=vmem, size = 0x12000, scoped, tag = 'internal scratch']
  %s0 = inlined_call_operand.vmem [shape: bf16[8,192], index: 0, kind: input, shape index: {}]
  %s1 = inlined_call_operand.vmem [shape: bf16[704,32], index: 1, kind: input, shape index: {}]
  %s2 = inlined_call_operand.vmem [shape: bf16[64,128], index: 2, kind: input, shape index: {}]
  %s3 = inlined_call_operand.vmem [shape: f32[48,32], index: 3, kind: input, shape index: {}]
  %s4 = inlined_call_operand.vmem [shape: f32[2,128], index: 4, kind: input, shape index: {}]
  %s5 = inlined_call_operand.hbm [shape: f32[2,32], index: 5, kind: output, shape index: {}]
  %s6 = sld [smem:[#allocation0]]
  $region30: #{dino_vit_forward.1} parent=0
    _
  %s8 = ssub.s32 1, %s6
  %s9 = scalar_select 0, %s8, %s6
  $region1: #{dino_vit_forward.1} parent=0
    #allocation2 [shape = 'u8[1024]{0}', space=vmem, size = 0x400, scoped, tag = 'output window, operand 0, single buffered']
    #allocation3 [shape = 's32[1]{0}', space=sflag, size = 0x4, scoped, tag = 'scoped memory for dino_vit_forward.1']
    %10 = vsyncpa [#allocation3], 0
    // Predicated region
    $region2: #{dino_vit_forward.1} parent=1 // pred_check
      _
    $region3: #{dino_vit_forward.1} parent=1 // pred_check_branch
      %12 = sbr.rel (0) target = $region5
    $region4: #{dino_vit_forward.1} parent=1 // pred_region
      _
    $region5: #{dino_vit_forward.1} parent=1 // pred_fallthru
      _
    // Predicated region
    $region6: #{dino_vit_forward.1} parent=1 // pred_check
      _
    $region7: #{dino_vit_forward.1} parent=1 // pred_check_branch
      %14 = sbr.rel (0) target = $region9
    $region8: #{dino_vit_forward.1} parent=1 // pred_region
      _
    $region9: #{dino_vit_forward.1} parent=1 // pred_fallthru
      _
    // Predicated region
    $region10: #{dino_vit_forward.1} parent=1 // pred_check
      _
    $region11: #{dino_vit_forward.1} parent=1 // pred_check_branch
      %16 = sbr.rel (0) target = $region13
    $region12: #{dino_vit_forward.1} parent=1 // pred_region
      _
    $region13: #{dino_vit_forward.1} parent=1 // pred_fallthru
      _
    // Predicated region
    $region14: #{dino_vit_forward.1} parent=1 // pred_check
      _
    $region15: #{dino_vit_forward.1} parent=1 // pred_check_branch
      %18 = sbr.rel (0) target = $region17
    $region16: #{dino_vit_forward.1} parent=1 // pred_region
      _
    $region17: #{dino_vit_forward.1} parent=1 // pred_fallthru
      _
    // Predicated region
    $region18: #{dino_vit_forward.1} parent=1 // pred_check
      _
    $region19: #{dino_vit_forward.1} parent=1 // pred_check_branch
      %20 = sbr.rel (0) target = $region21
    $region20: #{dino_vit_forward.1} parent=1 // pred_region
      _
    $region21: #{dino_vit_forward.1} parent=1 // pred_fallthru
      _
    %v22 = vld [vmem:[%s0] sm:$0xff]
    %v23 = vld [vmem:[%s1] sm:$0xf]
    %v24 = vld [vmem:[%s1 + $0x4] sm:$0xf]
    %v25 = vld [vmem:[%s1 + $0x8] sm:$0xf]
    %v26 = vld [vmem:[%s1 + $0xc] sm:$0xf]
    %v27 = vld [vmem:[%s1 + $0x10] sm:$0xf]
    %v28 = vld [vmem:[%s1 + $0x14] sm:$0xf]
    %v29 = vld [vmem:[%s1 + $0x18] sm:$0xf]
    %v30 = vld [vmem:[%s1 + $0x1c] sm:$0xf]
    %v31 = vld [vmem:[%s1 + $0x20] sm:$0xf]
    %v32 = vld [vmem:[%s1 + $0x24] sm:$0xf]
    %v33 = vld [vmem:[%s1 + $0x28] sm:$0xf]
    %v34 = vld [vmem:[%s1 + $0x2c] sm:$0xf]
    %v35 = vld [vmem:[%s1 + $0x30] sm:$0xf]
    %v36 = vld [vmem:[%s1 + $0x34] sm:$0xf]
    %v37 = vld [vmem:[%s1 + $0x38] sm:$0xf]
    %v38 = vld [vmem:[%s1 + $0x3c] sm:$0xf]
    %v39 = vld [vmem:[%s1 + $0x40] sm:$0xf]
    %v40 = vld [vmem:[%s1 + $0x44] sm:$0xf]
    %v41 = vld [vmem:[%s1 + $0x48] sm:$0xf]
    %v42 = vld [vmem:[%s1 + $0x4c] sm:$0xf]
    %v43 = vld [vmem:[%s1 + $0x50] sm:$0xf]
    %v44 = vld [vmem:[%s1 + $0x54] sm:$0xf]
    %v45 = vld [vmem:[%s1 + $0x58] sm:$0xf]
    %v46 = vld [vmem:[%s1 + $0x5c] sm:$0xf]
    %v47 = vld [vmem:[%s3 + $0x9] sm:$0x1]
    %v48 = vlaneseq
    %v49 = vshrl.u32 %v48, 7
    %v50 = vsub.s32 0, %v49
    %v51 = vrot.slane %v47, %v50
    %v53 = vunpack.c.l.b16 %v22
    %v54 = vunpack.c.h.b16 %v22
    %v55 = vpack.c.b16 %v53, %v53
    %v56 = vpack.c.b16 %v54, %v54
    %v82 = vunpack.c.l.b16 %v23
    %v83 = vunpack.c.l.b16 %v24
    %v84 = vunpack.c.l.b16 %v25
    %v85 = vunpack.c.l.b16 %v26
    %v86 = vunpack.c.l.b16 %v27
    %v87 = vunpack.c.l.b16 %v28
    %v88 = vunpack.c.l.b16 %v29
    %v89 = vunpack.c.l.b16 %v30
    %v90 = vunpack.c.l.b16 %v31
    %v91 = vunpack.c.l.b16 %v32
    %v92 = vunpack.c.l.b16 %v33
    %v93 = vunpack.c.l.b16 %v34
    %v94 = vunpack.c.l.b16 %v35
    %v95 = vunpack.c.l.b16 %v36
    %v96 = vunpack.c.l.b16 %v37
    %v97 = vunpack.c.l.b16 %v38
    %v98 = vunpack.c.l.b16 %v39
    %v99 = vunpack.c.l.b16 %v40
    %v100 = vunpack.c.l.b16 %v41
    %v101 = vunpack.c.l.b16 %v42
    %v102 = vunpack.c.l.b16 %v43
    %v103 = vunpack.c.l.b16 %v44
    %v104 = vunpack.c.l.b16 %v45
    %v105 = vunpack.c.l.b16 %v46
    %v106 = vpack.c.b16 %v83, %v82
    %v107 = vpack.c.b16 %v85, %v84
    %v108 = vpack.c.b16 %v87, %v86
    %v109 = vpack.c.b16 %v89, %v88
    %v110 = vpack.c.b16 %v91, %v90
    %v111 = vpack.c.b16 %v93, %v92
    %v112 = vpack.c.b16 %v95, %v94
    %v113 = vpack.c.b16 %v97, %v96
    %v114 = vpack.c.b16 %v99, %v98
    %v115 = vpack.c.b16 %v101, %v100
    %v116 = vpack.c.b16 %v103, %v102
    %v117 = vpack.c.b16 %v105, %v104
    %vm130 = vcmask 523264
    %v132 = vsel %vm130, %v56, 0
    %134 = vmatprep.subr.bf16.mxu0 0
    %135 = vmatpush1.bf16.msra.mxu0 %v106
    %136 = vmatprep.subr.bf16.mxu0 0
    %137 = vmatpush1.bf16.msra.mxu0 %v107
    %138 = vmatprep.subr.bf16.mxu0 0
    %139 = vmatpush1.bf16.msra.mxu0 %v108
    %140 = vmatprep.subr.bf16.mxu0 0
    %141 = vmatpush1.bf16.msra.mxu0 %v109
    %142 = vmatprep.subr.bf16.mxu0 0
    %143 = vmatpush1.bf16.msra.mxu0 %v110
    %144 = vmatprep.subr.bf16.mxu0 0
    %145 = vmatpush1.bf16.msra.mxu0 %v111
    %146 = vmatprep.subr.bf16.mxu0 0
    %147 = vmatpush1.bf16.msra.mxu0 %v112
    %148 = vmatprep.subr.bf16.mxu0 0
    %149 = vmatpush1.bf16.msra.mxu0 %v113
    %150 = vmatprep.subr.bf16.mxu0 0
    %151 = vmatpush1.bf16.msra.mxu0 %v114
    %152 = vmatprep.subr.bf16.mxu0 0
    %153 = vmatpush1.bf16.msra.mxu0 %v115
    %154 = vmatprep.subr.bf16.mxu0 0
    %155 = vmatpush1.bf16.msra.mxu0 %v116
    %156 = vmatprep.subr.bf16.mxu0 0
    %157 = vmatpush1.bf16.msra.mxu0 %v117
    %158 = vmatprep.subr.bf16.mxu0 0
    %159 = vmatpush1.bf16.msra.mxu0 0
    %160 = vmatprep.subr.bf16.mxu0 0
    %161 = vmatpush1.bf16.msra.mxu0 0
    %162 = vmatprep.subr.bf16.mxu0 0
    %163 = vmatpush1.bf16.msra.mxu0 0
    %164 = vmatprep.subr.bf16.mxu0 0
    %165 = vmatpush1.bf16.msra.mxu0 0
    %166 = vmatprep.mubr.bf16.mxu0 %v132
    %167 = vmatmul.mubr.bf16.gmra.mrb[0].mxu0 %v55
    %v168 = vpop.f32.mrb[0].mxu0
    %v169 = vadd.f32 %v51, %v168
    %v170 = vpop.f32.mrb[0].mxu0
    %v171 = vpop.f32.mrb[0].mxu0
    %v172 = vpop.f32.mrb[0].mxu0
    %173 = vdwg.mxu0
    %v174 = vld [vmem:[%s3] sm:$0xff]
    %v175 = vadd.f32 %v169, %v174
    %v176 = vld [vmem:[%s3 + $0x8] sm:$0x1]
    %v177 = vlaneseq
    %v178 = vshrl.u32 %v177, 7
    %v179 = vsub.s32 0, %v178
    %v180 = vrot.slane %v176, %v179
    %v181 = vlaneseq
    %v182 = vshrl.u32 %v181, 7
    %v183 = vadd.s32 %v182, 8
    %v184 = vadd.s32 %v182, 16
    %v185 = vadd.s32 %v182, 24
    %v186 = vadd.s32 %v182, 32
    %v187 = vadd.s32 %v182, 40
    %v188 = vadd.s32 %v182, 48
    %v189 = vadd.s32 %v182, 56
    %v190 = vlaneseq
    %v191 = vand.u32 %v190, 127
    %v192 = vand.u32 %v182, 15
    %v193 = vand.u32 %v183, 15
    %v194 = vand.u32 %v184, 15
    %v195 = vand.u32 %v185, 15
    %v196 = vand.u32 %v186, 15
    %v197 = vand.u32 %v187, 15
    %v198 = vand.u32 %v188, 15
    %v199 = vand.u32 %v189, 15
    %vm200 = vcmp.eq.s32.totalorder %v192, %v191
    %vm201 = vcmp.eq.s32.totalorder %v193, %v191
    %vm202 = vcmp.eq.s32.totalorder %v194, %v191
    %vm203 = vcmp.eq.s32.totalorder %v195, %v191
    %vm204 = vcmp.eq.s32.totalorder %v196, %v191
    %vm205 = vcmp.eq.s32.totalorder %v197, %v191
    %vm206 = vcmp.eq.s32.totalorder %v198, %v191
    %vm207 = vcmp.eq.s32.totalorder %v199, %v191
    %v208 = vsel %vm200, 1.0, 0.0
    %v209 = vsel %vm201, 1.0, 0.0
    %v210 = vsel %vm202, 1.0, 0.0
    %v211 = vsel %vm203, 1.0, 0.0
    %v212 = vsel %vm204, 1.0, 0.0
    %v213 = vsel %vm205, 1.0, 0.0
    %v214 = vsel %vm206, 1.0, 0.0
    %v215 = vsel %vm207, 1.0, 0.0
    %v216 = vpack.c.bf16 %v209, %v208
    %v217 = vpack.c.bf16 %v211, %v210
    %v218 = vpack.c.bf16 %v213, %v212
    %v219 = vpack.c.bf16 %v215, %v214
    %vm220 = vcmp.lt.s32.totalorder %v192, 8
    %vm221 = vcmp.lt.s32.totalorder %v193, 8
    %vm222 = vcmp.lt.s32.totalorder %v194, 8
    %vm223 = vcmp.lt.s32.totalorder %v195, 8
    %vm224 = vcmp.lt.s32.totalorder %v196, 8
    %vm225 = vcmp.lt.s32.totalorder %v197, 8
    %vm226 = vcmp.lt.s32.totalorder %v198, 8
    %vm227 = vcmp.lt.s32.totalorder %v199, 8
    %v228 = vshra.s32 %v192, 2
    %v229 = vshra.s32 %v193, 2
    %v230 = vshra.s32 %v194, 2
    %v231 = vshra.s32 %v195, 2
    %v232 = vshra.s32 %v196, 2
    %v233 = vshra.s32 %v197, 2
    %v234 = vshra.s32 %v198, 2
    %v235 = vshra.s32 %v199, 2
    %v236 = vsub.s32 %v192, 8
    %v237 = vsub.s32 %v193, 8
    %v238 = vsub.s32 %v194, 8
    %v239 = vsub.s32 %v195, 8
    %v240 = vsub.s32 %v196, 8
    %v241 = vsub.s32 %v197, 8
    %v242 = vsub.s32 %v198, 8
    %v243 = vsub.s32 %v199, 8
    %v244 = vsel %vm220, %v228, %v236
    %v245 = vsel %vm221, %v229, %v237
    %v246 = vsel %vm222, %v230, %v238
    %v247 = vsel %vm223, %v231, %v239
    %v248 = vsel %vm224, %v232, %v240
    %v249 = vsel %vm225, %v233, %v241
    %v250 = vsel %vm226, %v234, %v242
    %v251 = vsel %vm227, %v235, %v243
    %vm252 = vcmp.lt.s32.totalorder %v191, 8
    %v253 = vshra.s32 %v191, 2
    %v254 = vsub.s32 %v191, 8
    %v255 = vsel %vm252, %v253, %v254
    %vm256 = vcmp.eq.s32.totalorder %v244, %v255
    %vm257 = vcmp.eq.s32.totalorder %v245, %v255
    %vm258 = vcmp.eq.s32.totalorder %v246, %v255
    %vm259 = vcmp.eq.s32.totalorder %v247, %v255
    %vm260 = vcmp.eq.s32.totalorder %v248, %v255
    %vm261 = vcmp.eq.s32.totalorder %v249, %v255
    %vm262 = vcmp.eq.s32.totalorder %v250, %v255
    %vm263 = vcmp.eq.s32.totalorder %v251, %v255
    %vm264 = vcmp.ge.s32.totalorder %v192, 10
    %vm265 = vcmp.ge.s32.totalorder %v193, 10
    %vm266 = vcmp.ge.s32.totalorder %v194, 10
    %vm267 = vcmp.ge.s32.totalorder %v195, 10
    %vm268 = vcmp.ge.s32.totalorder %v196, 10
    %vm269 = vcmp.ge.s32.totalorder %v197, 10
    %vm270 = vcmp.ge.s32.totalorder %v198, 10
    %vm271 = vcmp.ge.s32.totalorder %v199, 10
    %vm272 = vmor %vm256, %vm264
    %vm273 = vmor %vm257, %vm265
    %vm274 = vmor %vm258, %vm266
    %vm275 = vmor %vm259, %vm267
    %vm276 = vmor %vm260, %vm268
    %vm277 = vmor %vm261, %vm269
    %vm278 = vmor %vm262, %vm270
    %vm279 = vmor %vm263, %vm271
    %v280 = vsel %vm272, 0.0, -1e+30
    %v281 = vsel %vm273, 0.0, -1e+30
    %v282 = vsel %vm274, 0.0, -1e+30
    %v283 = vsel %vm275, 0.0, -1e+30
    %v284 = vsel %vm276, 0.0, -1e+30
    %v285 = vsel %vm277, 0.0, -1e+30
    %v286 = vsel %vm278, 0.0, -1e+30
    %v287 = vsel %vm279, 0.0, -1e+30
    %v288 = vand.u32 %v191, 15
    %vm289 = vcmp.eq.s32.totalorder %v288, %v182
    %vm290 = vcmp.eq.s32.totalorder %v288, %v183
    %v291 = vsel %vm289, 1.0, 0.0
    %v292 = vsel %vm290, 1.0, 0.0
    %v293 = vpack.c.bf16 %v292, %v291
    %v294 = vshra.s32 %v182, 4
    %v295 = vshra.s32 %v183, 4
    %v296 = vshra.s32 %v184, 4
    %v297 = vshra.s32 %v185, 4
    %v298 = vshra.s32 %v186, 4
    %v299 = vshra.s32 %v187, 4
    %v300 = vshra.s32 %v188, 4
    %v301 = vshra.s32 %v189, 4
    %v302 = vshra.s32 %v191, 3
    %vm303 = vcmp.eq.s32.totalorder %v294, %v302
    %vm304 = vcmp.eq.s32.totalorder %v295, %v302
    %vm305 = vcmp.eq.s32.totalorder %v296, %v302
    %vm306 = vcmp.eq.s32.totalorder %v297, %v302
    %vm307 = vcmp.eq.s32.totalorder %v298, %v302
    %vm308 = vcmp.eq.s32.totalorder %v299, %v302
    %vm309 = vcmp.eq.s32.totalorder %v300, %v302
    %vm310 = vcmp.eq.s32.totalorder %v301, %v302
    %v311 = vsel %vm303, 1.0, 0.0
    %v312 = vsel %vm304, 1.0, 0.0
    %v313 = vsel %vm305, 1.0, 0.0
    %v314 = vsel %vm306, 1.0, 0.0
    %v315 = vsel %vm307, 1.0, 0.0
    %v316 = vsel %vm308, 1.0, 0.0
    %v317 = vsel %vm309, 1.0, 0.0
    %v318 = vsel %vm310, 1.0, 0.0
    %v319 = vld [vmem:[%s3 + $0x10] sm:$0x1]
    %v320 = vld [vmem:[%s3 + $0x11] sm:$0x1]
    %vm321 = vcmask 261120
    %v322 = vsel %vm321, %v175, 0.0
    %323 = vadd.xlane.f32.xlu0 %v322
    %v324 = vpop.xlane.xlu0 %323
    %vm325 = vcmask 254976
    %v326 = vsel %vm325, %v180, 0.0
    %327 = vadd.xlane.f32.xlu0 %v326
    %v328 = vpop.xlane.xlu0 %327
    %v329 = vrcp.pop 32.0
    %v330 = vmul.f32 %v324, %v329
    %v331 = vmul.f32 %v328, %v329
    %v332 = vsub.f32 %v175, %v330
    %v333 = vsub.f32 %v180, %v331
    %v334 = vmul.f32 %v332, %v332
    %v335 = vmul.f32 %v333, %v333
    %v336 = vsel %vm321, %v334, 0.0
    %337 = vadd.xlane.f32.xlu0 %v336
    %v338 = vpop.xlane.xlu0 %337
    %v339 = vsel %vm325, %v335, 0.0
    %340 = vadd.xlane.f32.xlu0 %v339
    %v341 = vpop.xlane.xlu0 %340
    %v342 = vmul.f32 %v338, %v329
    %v343 = vmul.f32 %v341, %v329
    %v344 = vadd.f32 %v342, 1e-06
    %v345 = vadd.f32 %v343, 1e-06
    %v346 = vrsqrt.pop %v344
    %v347 = vrsqrt.pop %v345
    %v348 = vmul.f32 %v332, %v346
    %v349 = vmul.f32 %v333, %v347
    %v350 = vlaneseq
    %v351 = vshrl.u32 %v350, 7
    %v352 = vsub.s32 0, %v351
    %v353 = vrot.slane %v319, %v352
    %v354 = vmul.f32 %v348, %v353
    %v355 = vmul.f32 %v349, %v353
    %v356 = vlaneseq
    %v357 = vshrl.u32 %v356, 7
    %v358 = vsub.s32 0, %v357
    %v359 = vrot.slane %v320, %v358
    %v360 = vadd.f32 %v354, %v359
    %v361 = vadd.f32 %v355, %v359
    %v362 = vpack.c.bf16 %v361, %v360
    %v363 = vld [vmem:[%s1 + $0x60] sm:$0xf]
    %v364 = vld [vmem:[%s1 + $0x64] sm:$0xf]
    %v365 = vld [vmem:[%s1 + $0x68] sm:$0xf]
    %v366 = vld [vmem:[%s1 + $0x6c] sm:$0xf]
    %v367 = vld [vmem:[%s3 + $0x12] sm:$0x1]
    %v368 = vlaneseq
    %v369 = vshrl.u32 %v368, 7
    %v370 = vsub.s32 0, %v369
    %v371 = vrot.slane %v367, %v370
    %v376 = vunpack.c.l.b16 %v363
    %v377 = vunpack.c.l.b16 %v364
    %v378 = vunpack.c.l.b16 %v365
    %v379 = vunpack.c.l.b16 %v366
    %v380 = vpack.c.b16 %v377, %v376
    %v381 = vpack.c.b16 %v379, %v378
    %v385 = vsel %vm321, %v362, 0
    %387 = vmatprep.subr.bf16.mxu0 0
    %388 = vmatpush1.bf16.msra.mxu0 %v380
    %389 = vmatprep.subr.bf16.mxu0 0
    %390 = vmatpush1.bf16.msra.mxu0 %v381
    %391 = vmatprep.subr.bf16.mxu0 0
    %392 = vmatpush1.bf16.msra.mxu0 0
    %393 = vmatprep.subr.bf16.mxu0 0
    %394 = vmatpush1.bf16.msra.mxu0 0
    %395 = vmatprep.subr.bf16.mxu0 0
    %396 = vmatpush1.bf16.msra.mxu0 0
    %397 = vmatprep.subr.bf16.mxu0 0
    %398 = vmatpush1.bf16.msra.mxu0 0
    %399 = vmatprep.subr.bf16.mxu0 0
    %400 = vmatpush1.bf16.msra.mxu0 0
    %401 = vmatprep.subr.bf16.mxu0 0
    %402 = vmatpush1.bf16.msra.mxu0 0
    %403 = vmatprep.subr.bf16.mxu0 0
    %404 = vmatpush1.bf16.msra.mxu0 0
    %405 = vmatprep.subr.bf16.mxu0 0
    %406 = vmatpush1.bf16.msra.mxu0 0
    %407 = vmatprep.subr.bf16.mxu0 0
    %408 = vmatpush1.bf16.msra.mxu0 0
    %409 = vmatprep.subr.bf16.mxu0 0
    %410 = vmatpush1.bf16.msra.mxu0 0
    %411 = vmatprep.subr.bf16.mxu0 0
    %412 = vmatpush1.bf16.msra.mxu0 0
    %413 = vmatprep.subr.bf16.mxu0 0
    %414 = vmatpush1.bf16.msra.mxu0 0
    %415 = vmatprep.subr.bf16.mxu0 0
    %416 = vmatpush1.bf16.msra.mxu0 0
    %417 = vmatprep.subr.bf16.mxu0 0
    %418 = vmatpush1.bf16.msra.mxu0 0
    %419 = vmatprep.mubr.bf16.mxu0 0
    %420 = vmatmul.mubr.bf16.gmra.mrb[0].mxu0 %v385
    %v421 = vpop.f32.mrb[0].mxu0
    %v422 = vadd.f32 %v371, %v421
    %v423 = vpop.f32.mrb[0].mxu0
    %v424 = vpop.f32.mrb[0].mxu0
    %v425 = vadd.f32 %v371, %v424
    %v426 = vpop.f32.mrb[0].mxu0
    %427 = vdwg.mxu0
    %v428 = vmul.f32 %v422, 0.35355338
    %v429 = vmul.f32 %v425, 0.35355338
    %v430 = vld [vmem:[%s1 + $0x70] sm:$0xf]
    %v431 = vld [vmem:[%s1 + $0x74] sm:$0xf]
    %v432 = vld [vmem:[%s1 + $0x78] sm:$0xf]
    %v433 = vld [vmem:[%s1 + $0x7c] sm:$0xf]
    %v434 = vld [vmem:[%s3 + $0x13] sm:$0x1]
    %v435 = vlaneseq
    %v436 = vshrl.u32 %v435, 7
    %v437 = vsub.s32 0, %v436
    %v438 = vrot.slane %v434, %v437
    %v443 = vunpack.c.l.b16 %v430
    %v444 = vunpack.c.l.b16 %v431
    %v445 = vunpack.c.l.b16 %v432
    %v446 = vunpack.c.l.b16 %v433
    %v447 = vpack.c.b16 %v444, %v443
    %v448 = vpack.c.b16 %v446, %v445
    %451 = vmatprep.subr.bf16.mxu0 0
    %452 = vmatpush1.bf16.msra.mxu0 %v447
    %453 = vmatprep.subr.bf16.mxu0 0
    %454 = vmatpush1.bf16.msra.mxu0 %v448
    %455 = vmatprep.subr.bf16.mxu0 0
    %456 = vmatpush1.bf16.msra.mxu0 0
    %457 = vmatprep.subr.bf16.mxu0 0
    %458 = vmatpush1.bf16.msra.mxu0 0
    %459 = vmatprep.subr.bf16.mxu0 0
    %460 = vmatpush1.bf16.msra.mxu0 0
    %461 = vmatprep.subr.bf16.mxu0 0
    %462 = vmatpush1.bf16.msra.mxu0 0
    %463 = vmatprep.subr.bf16.mxu0 0
    %464 = vmatpush1.bf16.msra.mxu0 0
    %465 = vmatprep.subr.bf16.mxu0 0
    %466 = vmatpush1.bf16.msra.mxu0 0
    %467 = vmatprep.subr.bf16.mxu0 0
    %468 = vmatpush1.bf16.msra.mxu0 0
    %469 = vmatprep.subr.bf16.mxu0 0
    %470 = vmatpush1.bf16.msra.mxu0 0
    %471 = vmatprep.subr.bf16.mxu0 0
    %472 = vmatpush1.bf16.msra.mxu0 0
    %473 = vmatprep.subr.bf16.mxu0 0
    %474 = vmatpush1.bf16.msra.mxu0 0
    %475 = vmatprep.subr.bf16.mxu0 0
    %476 = vmatpush1.bf16.msra.mxu0 0
    %477 = vmatprep.subr.bf16.mxu0 0
    %478 = vmatpush1.bf16.msra.mxu0 0
    %479 = vmatprep.subr.bf16.mxu0 0
    %480 = vmatpush1.bf16.msra.mxu0 0
    %481 = vmatprep.subr.bf16.mxu0 0
    %482 = vmatpush1.bf16.msra.mxu0 0
    %483 = vmatprep.mubr.bf16.mxu0 0
    %484 = vmatmul.mubr.bf16.gmra.mrb[0].mxu0 %v385
    %v485 = vpop.f32.mrb[0].mxu0
    %v486 = vadd.f32 %v438, %v485
    %v487 = vpop.f32.mrb[0].mxu0
    %v488 = vpop.f32.mrb[0].mxu0
    %v489 = vadd.f32 %v438, %v488
    %v490 = vpop.f32.mrb[0].mxu0
    %491 = vdwg.mxu0
    %v492 = vld [vmem:[%s1 + $0x80] sm:$0xf]
    %v493 = vld [vmem:[%s1 + $0x84] sm:$0xf]
    %v494 = vld [vmem:[%s1 + $0x88] sm:$0xf]
    %v495 = vld [vmem:[%s1 + $0x8c] sm:$0xf]
    %v496 = vld [vmem:[%s3 + $0x14] sm:$0x1]
    %v497 = vlaneseq
    %v498 = vshrl.u32 %v497, 7
    %v499 = vsub.s32 0, %v498
    %v500 = vrot.slane %v496, %v499
    %v505 = vunpack.c.l.b16 %v492
    %v506 = vunpack.c.l.b16 %v493
    %v507 = vunpack.c.l.b16 %v494
    %v508 = vunpack.c.l.b16 %v495
    %v509 = vpack.c.b16 %v506, %v505
    %v510 = vpack.c.b16 %v508, %v507
    %513 = vmatprep.subr.bf16.mxu0 0
    %514 = vmatpush1.bf16.msra.mxu0 %v509
    %515 = vmatprep.subr.bf16.mxu0 0
    %516 = vmatpush1.bf16.msra.mxu0 %v510
    %517 = vmatprep.subr.bf16.mxu0 0
    %518 = vmatpush1.bf16.msra.mxu0 0
    %519 = vmatprep.subr.bf16.mxu0 0
    %520 = vmatpush1.bf16.msra.mxu0 0
    %521 = vmatprep.subr.bf16.mxu0 0
    %522 = vmatpush1.bf16.msra.mxu0 0
    %523 = vmatprep.subr.bf16.mxu0 0
    %524 = vmatpush1.bf16.msra.mxu0 0
    %525 = vmatprep.subr.bf16.mxu0 0
    %526 = vmatpush1.bf16.msra.mxu0 0
    %527 = vmatprep.subr.bf16.mxu0 0
    %528 = vmatpush1.bf16.msra.mxu0 0
    %529 = vmatprep.subr.bf16.mxu0 0
    %530 = vmatpush1.bf16.msra.mxu0 0
    %531 = vmatprep.subr.bf16.mxu0 0
    %532 = vmatpush1.bf16.msra.mxu0 0
    %533 = vmatprep.subr.bf16.mxu0 0
    %534 = vmatpush1.bf16.msra.mxu0 0
    %535 = vmatprep.subr.bf16.mxu0 0
    %536 = vmatpush1.bf16.msra.mxu0 0
    %537 = vmatprep.subr.bf16.mxu0 0
    %538 = vmatpush1.bf16.msra.mxu0 0
    %539 = vmatprep.subr.bf16.mxu0 0
    %540 = vmatpush1.bf16.msra.mxu0 0
    %541 = vmatprep.subr.bf16.mxu0 0
    %542 = vmatpush1.bf16.msra.mxu0 0
    %543 = vmatprep.subr.bf16.mxu0 0
    %544 = vmatpush1.bf16.msra.mxu0 0
    %545 = vmatprep.mubr.bf16.mxu0 0
    %546 = vmatmul.mubr.bf16.gmra.mrb[0].mxu0 %v385
    %v547 = vpop.f32.mrb[0].mxu0
    %v548 = vadd.f32 %v500, %v547
    %v549 = vpop.f32.mrb[0].mxu0
    %v550 = vpop.f32.mrb[0].mxu0
    %v551 = vadd.f32 %v500, %v550
    %v552 = vpop.f32.mrb[0].mxu0
    %553 = vdwg.mxu0
    %v554 = vpack.c.bf16 %v429, %v428
    %vm555 = vcmask 80896
    %v557 = vsel %vm555, %v216, 0
    %v560 = vsel %vm555, %v217, 0
    %v563 = vsel %vm555, %v218, 0
    %v566 = vsel %vm555, %v219, 0
    %vm568 = vcmask 1044480
    %v570 = vsel %vm568, %v554, 0
    %572 = vmatprep.subr.bf16.mxu0 0
    %573 = vmatpush1.bf16.msra.mxu0 %v570
    %574 = vmatprep.subr.bf16.mxu0 0
    %575 = vmatpush1.bf16.msra.mxu0 0
    %576 = vmatprep.subr.bf16.mxu0 0
    %577 = vmatpush1.bf16.msra.mxu0 0
    %578 = vmatprep.subr.bf16.mxu0 0
    %579 = vmatpush1.bf16.msra.mxu0 0
    %580 = vmatprep.subr.bf16.mxu0 0
    %581 = vmatpush1.bf16.msra.mxu0 0
    %582 = vmatprep.subr.bf16.mxu0 0
    %583 = vmatpush1.bf16.msra.mxu0 0
    %584 = vmatprep.subr.bf16.mxu0 0
    %585 = vmatpush1.bf16.msra.mxu0 0
    %586 = vmatprep.subr.bf16.mxu0 0
    %587 = vmatpush1.bf16.msra.mxu0 0
    %588 = vmatprep.subr.bf16.mxu0 0
    %589 = vmatpush1.bf16.msra.mxu0 0
    %590 = vmatprep.subr.bf16.mxu0 0
    %591 = vmatpush1.bf16.msra.mxu0 0
    %592 = vmatprep.subr.bf16.mxu0 0
    %593 = vmatpush1.bf16.msra.mxu0 0
    %594 = vmatprep.subr.bf16.mxu0 0
    %595 = vmatpush1.bf16.msra.mxu0 0
    %596 = vmatprep.subr.bf16.mxu0 0
    %597 = vmatpush1.bf16.msra.mxu0 0
    %598 = vmatprep.subr.bf16.mxu0 0
    %599 = vmatpush1.bf16.msra.mxu0 0
    %600 = vmatprep.subr.bf16.mxu0 0
    %601 = vmatpush1.bf16.msra.mxu0 0
    %602 = vmatprep.subr.bf16.mxu0 0
    %603 = vmatpush1.bf16.msra.mxu0 0
    %604 = vmatprep.mubr.bf16.mxu0 0
    %605 = vmatmul.mubr.bf16.gmra.mrb[0].mxu0 %v557
    %v606 = vpop.f32.mrb[0].mxu0
    %v607 = vadd.f32 0.0, %v606
    %v608 = vpop.f32.mrb[0].mxu0
    %v609 = vpop.f32.mrb[0].mxu0
    %v610 = vadd.f32 0.0, %v609
    %v611 = vpop.f32.mrb[0].mxu0
    %612 = vmatprep.mubr.bf16.mxu0 0
    %613 = vmatmul.mubr.bf16.gmra.mrb[0].mxu0 %v560
    %v614 = vpop.f32.mrb[0].mxu0
    %v615 = vadd.f32 0.0, %v614
    %v616 = vpop.f32.mrb[0].mxu0
    %v617 = vpop.f32.mrb[0].mxu0
    %v618 = vadd.f32 0.0, %v617
    %v619 = vpop.f32.mrb[0].mxu0
    %620 = vmatprep.mubr.bf16.mxu0 0
    %621 = vmatmul.mubr.bf16.gmra.mrb[0].mxu0 %v563
    %v622 = vpop.f32.mrb[0].mxu0
    %v623 = vadd.f32 0.0, %v622
    %v624 = vpop.f32.mrb[0].mxu0
    %v625 = vpop.f32.mrb[0].mxu0
    %v626 = vadd.f32 0.0, %v625
    %v627 = vpop.f32.mrb[0].mxu0
    %628 = vmatprep.mubr.bf16.mxu0 0
    %629 = vmatmul.mubr.bf16.gmra.mrb[0].mxu0 %v566
    %v630 = vpop.f32.mrb[0].mxu0
    %v631 = vadd.f32 0.0, %v630
    %v632 = vpop.f32.mrb[0].mxu0
    %v633 = vpop.f32.mrb[0].mxu0
    %v634 = vadd.f32 0.0, %v633
    %v635 = vpop.f32.mrb[0].mxu0
    %636 = vdwg.mxu0
    %v637 = vmul.f32 %v607, %v311
    %v638 = vmul.f32 %v610, %v312
    %v639 = vmul.f32 %v615, %v313
    %v640 = vmul.f32 %v618, %v314
    %v641 = vmul.f32 %v623, %v315
    %v642 = vmul.f32 %v626, %v316
    %v643 = vmul.f32 %v631, %v317
    %v644 = vmul.f32 %v634, %v318
    %v645 = vpack.c.bf16 %v638, %v637
    %v646 = vpack.c.bf16 %v640, %v639
    %v647 = vpack.c.bf16 %v642, %v641
    %v648 = vpack.c.bf16 %v644, %v643
    %v649 = vpack.c.bf16 %v489, %v486
    %v651 = vsel %vm321, %v645, 0
    %v654 = vsel %vm321, %v646, 0
    %v657 = vsel %vm321, %v647, 0
    %v660 = vsel %vm321, %v648, 0
    %v663 = vsel %vm321, %v649, 0
    %665 = vmatprep.subr.bf16.mxu0 0
    %666 = vmatpush1.bf16.xpose.msra.mxu0 %v663
    %667 = vmatprep.subr.bf16.mxu0 0
    %668 = vmatpush1.bf16.xpose.msra.mxu0 0
    %669 = vmatprep.subr.bf16.mxu0 0
    %670 = vmatpush1.bf16.xpose.msra.mxu0 0
    %671 = vmatprep.subr.bf16.mxu0 0
    %672 = vmatpush1.bf16.xpose.msra.mxu0 0
    %673 = vmatprep.subr.bf16.mxu0 0
    %674 = vmatpush1.bf16.xpose.msra.mxu0 0
    %675 = vmatprep.subr.bf16.mxu0 0
    %676 = vmatpush1.bf16.xpose.msra.mxu0 0
    %677 = vmatprep.subr.bf16.mxu0 0
    %678 = vmatpush1.bf16.xpose.msra.mxu0 0
    %679 = vmatprep.subr.bf16.mxu0 0
    %680 = vmatpush1.bf16.xpose.msra.mxu0 0
    %681 = vmatprep.subr.bf16.mxu0 0
    %682 = vmatpush1.bf16.xpose.msra.mxu0 0
    %683 = vmatprep.subr.bf16.mxu0 0
    %684 = vmatpush1.bf16.xpose.msra.mxu0 0
    %685 = vmatprep.subr.bf16.mxu0 0
    %686 = vmatpush1.bf16.xpose.msra.mxu0 0
    %687 = vmatprep.subr.bf16.mxu0 0
    %688 = vmatpush1.bf16.xpose.msra.mxu0 0
    %689 = vmatprep.subr.bf16.mxu0 0
    %690 = vmatpush1.bf16.xpose.msra.mxu0 0
    %691 = vmatprep.subr.bf16.mxu0 0
    %692 = vmatpush1.bf16.xpose.msra.mxu0 0
    %693 = vmatprep.subr.bf16.mxu0 0
    %694 = vmatpush1.bf16.xpose.msra.mxu0 0
    %695 = vmatprep.subr.bf16.mxu0 0
    %696 = vmatpush1.bf16.xpose.msra.mxu0 0
    %697 = vmatprep.mubr.bf16.mxu0 0
    %698 = vmatmul.mubr.bf16.gmra.mrb[0].mxu0 %v651
    %v699 = vpop.f32.mrb[0].mxu0
    %v700 = vadd.f32 %v280, %v699
    %v701 = vpop.f32.mrb[0].mxu0
    %v702 = vpop.f32.mrb[0].mxu0
    %v703 = vadd.f32 %v281, %v702
    %v704 = vpop.f32.mrb[0].mxu0
    %705 = vmatprep.mubr.bf16.mxu0 0
    %706 = vmatmul.mubr.bf16.gmra.mrb[0].mxu0 %v654
    %v707 = vpop.f32.mrb[0].mxu0
    %v708 = vadd.f32 %v282, %v707
    %v709 = vpop.f32.mrb[0].mxu0
    %v710 = vpop.f32.mrb[0].mxu0
    %v711 = vadd.f32 %v283, %v710
    %v712 = vpop.f32.mrb[0].mxu0
    %713 = vmatprep.mubr.bf16.mxu0 0
    %714 = vmatmul.mubr.bf16.gmra.mrb[0].mxu0 %v657
    %v715 = vpop.f32.mrb[0].mxu0
    %v716 = vadd.f32 %v284, %v715
    %v717 = vpop.f32.mrb[0].mxu0
    %v718 = vpop.f32.mrb[0].mxu0
    %v719 = vadd.f32 %v285, %v718
    %v720 = vpop.f32.mrb[0].mxu0
    %721 = vmatprep.mubr.bf16.mxu0 0
    %722 = vmatmul.mubr.bf16.gmra.mrb[0].mxu0 %v660
    %v723 = vpop.f32.mrb[0].mxu0
    %v724 = vadd.f32 %v286, %v723
    %v725 = vpop.f32.mrb[0].mxu0
    %v726 = vpop.f32.mrb[0].mxu0
    %v727 = vadd.f32 %v287, %v726
    %v728 = vpop.f32.mrb[0].mxu0
    %729 = vdwg.mxu0
    %v730 = vsel %vm555, %v700, -inf
    %731 = vmax.xlane.f32.xlu0 %v730
    %v732 = vpop.xlane.xlu0 %731
    %v733 = vsel %vm555, %v703, -inf
    %734 = vmax.xlane.f32.xlu0 %v733
    %v735 = vpop.xlane.xlu0 %734
    %v736 = vsel %vm555, %v708, -inf
    %737 = vmax.xlane.f32.xlu0 %v736
    %v738 = vpop.xlane.xlu0 %737
    %v739 = vsel %vm555, %v711, -inf
    %740 = vmax.xlane.f32.xlu0 %v739
    %v741 = vpop.xlane.xlu0 %740
    %v742 = vsel %vm555, %v716, -inf
    %743 = vmax.xlane.f32.xlu0 %v742
    %v744 = vpop.xlane.xlu0 %743
    %v745 = vsel %vm555, %v719, -inf
    %746 = vmax.xlane.f32.xlu0 %v745
    %v747 = vpop.xlane.xlu0 %746
    %v748 = vsel %vm555, %v724, -inf
    %749 = vmax.xlane.f32.xlu0 %v748
    %v750 = vpop.xlane.xlu0 %749
    %v751 = vsel %vm555, %v727, -inf
    %752 = vmax.xlane.f32.xlu0 %v751
    %v753 = vpop.xlane.xlu0 %752
    %v754 = vsub.f32 %v700, %v732
    %v755 = vsub.f32 %v703, %v735
    %v756 = vsub.f32 %v708, %v738
    %v757 = vsub.f32 %v711, %v741
    %v758 = vsub.f32 %v716, %v744
    %v759 = vsub.f32 %v719, %v747
    %v760 = vsub.f32 %v724, %v750
    %v761 = vsub.f32 %v727, %v753
    %v762 = vmul.f32 %v754, 1.442695
    %v763 = vpow.pop %v762
    %v764 = vmul.f32 %v755, 1.442695
    %v765 = vpow.pop %v764
    %v766 = vmul.f32 %v756, 1.442695
    %v767 = vpow.pop %v766
    %v768 = vmul.f32 %v757, 1.442695
    %v769 = vpow.pop %v768
    %v770 = vmul.f32 %v758, 1.442695
    %v771 = vpow.pop %v770
    %v772 = vmul.f32 %v759, 1.442695
    %v773 = vpow.pop %v772
    %v774 = vmul.f32 %v760, 1.442695
    %v775 = vpow.pop %v774
    %v776 = vmul.f32 %v761, 1.442695
    %v777 = vpow.pop %v776
    %v778 = vsel %vm555, %v763, 0.0
    %779 = vadd.xlane.f32.xlu0 %v778
    %v780 = vpop.xlane.xlu0 %779
    %v781 = vsel %vm555, %v765, 0.0
    %782 = vadd.xlane.f32.xlu0 %v781
    %v783 = vpop.xlane.xlu0 %782
    %v784 = vsel %vm555, %v767, 0.0
    %785 = vadd.xlane.f32.xlu0 %v784
    %v786 = vpop.xlane.xlu0 %785
    %v787 = vsel %vm555, %v769, 0.0
    %788 = vadd.xlane.f32.xlu0 %v787
    %v789 = vpop.xlane.xlu0 %788
    %v790 = vsel %vm555, %v771, 0.0
    %791 = vadd.xlane.f32.xlu0 %v790
    %v792 = vpop.xlane.xlu0 %791
    %v793 = vsel %vm555, %v773, 0.0
    %794 = vadd.xlane.f32.xlu0 %v793
    %v795 = vpop.xlane.xlu0 %794
    %v796 = vsel %vm555, %v775, 0.0
    %797 = vadd.xlane.f32.xlu0 %v796
    %v798 = vpop.xlane.xlu0 %797
    %v799 = vsel %vm555, %v777, 0.0
    %800 = vadd.xlane.f32.xlu0 %v799
    %v801 = vpop.xlane.xlu0 %800
    %v802 = vrcp.pop %v780
    %v803 = vrcp.pop %v783
    %v804 = vrcp.pop %v786
    %v805 = vrcp.pop %v789
    %v806 = vrcp.pop %v792
    %v807 = vrcp.pop %v795
    %v808 = vrcp.pop %v798
    %v809 = vrcp.pop %v801
    %v810 = vmul.f32 %v763, %v802
    %v811 = vmul.f32 %v765, %v803
    %v812 = vmul.f32 %v767, %v804
    %v813 = vmul.f32 %v769, %v805
    %v814 = vmul.f32 %v771, %v806
    %v815 = vmul.f32 %v773, %v807
    %v816 = vmul.f32 %v775, %v808
    %v817 = vmul.f32 %v777, %v809
    %v818 = vpack.c.bf16 %v811, %v810
    %v819 = vpack.c.bf16 %v813, %v812
    %v820 = vpack.c.bf16 %v815, %v814
    %v821 = vpack.c.bf16 %v817, %v816
    %v822 = vpack.c.bf16 %v551, %v548
    %v824 = vsel %vm555, %v818, 0
    %v827 = vsel %vm555, %v819, 0
    %v830 = vsel %vm555, %v820, 0
    %v833 = vsel %vm555, %v821, 0
    %v836 = vsel %vm568, %v822, 0
    %838 = vmatprep.subr.bf16.mxu0 0
    %839 = vmatpush1.bf16.msra.mxu0 %v836
    %840 = vmatprep.subr.bf16.mxu0 0
    %841 = vmatpush1.bf16.msra.mxu0 0
    %842 = vmatprep.subr.bf16.mxu0 0
    %843 = vmatpush1.bf16.msra.mxu0 0
    %844 = vmatprep.subr.bf16.mxu0 0
    %845 = vmatpush1.bf16.msra.mxu0 0
    %846 = vmatprep.subr.bf16.mxu0 0
    %847 = vmatpush1.bf16.msra.mxu0 0
    %848 = vmatprep.subr.bf16.mxu0 0
    %849 = vmatpush1.bf16.msra.mxu0 0
    %850 = vmatprep.subr.bf16.mxu0 0
    %851 = vmatpush1.bf16.msra.mxu0 0
    %852 = vmatprep.subr.bf16.mxu0 0
    %853 = vmatpush1.bf16.msra.mxu0 0
    %854 = vmatprep.subr.bf16.mxu0 0
    %855 = vmatpush1.bf16.msra.mxu0 0
    %856 = vmatprep.subr.bf16.mxu0 0
    %857 = vmatpush1.bf16.msra.mxu0 0
    %858 = vmatprep.subr.bf16.mxu0 0
    %859 = vmatpush1.bf16.msra.mxu0 0
    %860 = vmatprep.subr.bf16.mxu0 0
    %861 = vmatpush1.bf16.msra.mxu0 0
    %862 = vmatprep.subr.bf16.mxu0 0
    %863 = vmatpush1.bf16.msra.mxu0 0
    %864 = vmatprep.subr.bf16.mxu0 0
    %865 = vmatpush1.bf16.msra.mxu0 0
    %866 = vmatprep.subr.bf16.mxu0 0
    %867 = vmatpush1.bf16.msra.mxu0 0
    %868 = vmatprep.subr.bf16.mxu0 0
    %869 = vmatpush1.bf16.msra.mxu0 0
    %870 = vmatprep.mubr.bf16.mxu0 0
    %871 = vmatmul.mubr.bf16.gmra.mrb[0].mxu0 %v824
    %v872 = vpop.f32.mrb[0].mxu0
    %v873 = vadd.f32 0.0, %v872
    %v874 = vpop.f32.mrb[0].mxu0
    %v875 = vpop.f32.mrb[0].mxu0
    %v876 = vadd.f32 0.0, %v875
    %v877 = vpop.f32.mrb[0].mxu0
    %878 = vmatprep.mubr.bf16.mxu0 0
    %879 = vmatmul.mubr.bf16.gmra.mrb[0].mxu0 %v827
    %v880 = vpop.f32.mrb[0].mxu0
    %v881 = vadd.f32 0.0, %v880
    %v882 = vpop.f32.mrb[0].mxu0
    %v883 = vpop.f32.mrb[0].mxu0
    %v884 = vadd.f32 0.0, %v883
    %v885 = vpop.f32.mrb[0].mxu0
    %886 = vmatprep.mubr.bf16.mxu0 0
    %887 = vmatmul.mubr.bf16.gmra.mrb[0].mxu0 %v830
    %v888 = vpop.f32.mrb[0].mxu0
    %v889 = vadd.f32 0.0, %v888
    %v890 = vpop.f32.mrb[0].mxu0
    %v891 = vpop.f32.mrb[0].mxu0
    %v892 = vadd.f32 0.0, %v891
    %v893 = vpop.f32.mrb[0].mxu0
    %894 = vmatprep.mubr.bf16.mxu0 0
    %895 = vmatmul.mubr.bf16.gmra.mrb[0].mxu0 %v833
    %v896 = vpop.f32.mrb[0].mxu0
    %v897 = vadd.f32 0.0, %v896
    %v898 = vpop.f32.mrb[0].mxu0
    %v899 = vpop.f32.mrb[0].mxu0
    %v900 = vadd.f32 0.0, %v899
    %v901 = vpop.f32.mrb[0].mxu0
    %902 = vdwg.mxu0
    %v903 = vmul.f32 %v873, %v311
    %v904 = vmul.f32 %v876, %v312
    %v905 = vmul.f32 %v881, %v313
    %v906 = vmul.f32 %v884, %v314
    %v907 = vmul.f32 %v889, %v315
    %v908 = vmul.f32 %v892, %v316
    %v909 = vmul.f32 %v897, %v317
    %v910 = vmul.f32 %v900, %v318
    %v911 = vpack.c.bf16 %v904, %v903
    %v912 = vpack.c.bf16 %v906, %v905
    %v913 = vpack.c.bf16 %v908, %v907
    %v914 = vpack.c.bf16 %v910, %v909
    %v916 = vsel %vm130, %v293, 0
    %918 = vmatprep.subr.bf16.mxu0 0
    %919 = vmatpush1.bf16.msra.mxu0 %v911
    %920 = vmatprep.subr.bf16.mxu0 0
    %921 = vmatpush1.bf16.msra.mxu0 %v912
    %922 = vmatprep.subr.bf16.mxu0 0
    %923 = vmatpush1.bf16.msra.mxu0 %v913
    %924 = vmatprep.subr.bf16.mxu0 0
    %925 = vmatpush1.bf16.msra.mxu0 %v914
    %926 = vmatprep.subr.bf16.mxu0 0
    %927 = vmatpush1.bf16.msra.mxu0 0
    %928 = vmatprep.subr.bf16.mxu0 0
    %929 = vmatpush1.bf16.msra.mxu0 0
    %930 = vmatprep.subr.bf16.mxu0 0
    %931 = vmatpush1.bf16.msra.mxu0 0
    %932 = vmatprep.subr.bf16.mxu0 0
    %933 = vmatpush1.bf16.msra.mxu0 0
    %934 = vmatprep.subr.bf16.mxu0 0
    %935 = vmatpush1.bf16.msra.mxu0 0
    %936 = vmatprep.subr.bf16.mxu0 0
    %937 = vmatpush1.bf16.msra.mxu0 0
    %938 = vmatprep.subr.bf16.mxu0 0
    %939 = vmatpush1.bf16.msra.mxu0 0
    %940 = vmatprep.subr.bf16.mxu0 0
    %941 = vmatpush1.bf16.msra.mxu0 0
    %942 = vmatprep.subr.bf16.mxu0 0
    %943 = vmatpush1.bf16.msra.mxu0 0
    %944 = vmatprep.subr.bf16.mxu0 0
    %945 = vmatpush1.bf16.msra.mxu0 0
    %946 = vmatprep.subr.bf16.mxu0 0
    %947 = vmatpush1.bf16.msra.mxu0 0
    %948 = vmatprep.subr.bf16.mxu0 0
    %949 = vmatpush1.bf16.msra.mxu0 0
    %950 = vmatprep.mubr.bf16.mxu0 0
    %951 = vmatmul.mubr.bf16.gmra.mrb[0].mxu0 %v916
    %v952 = vpop.f32.mrb[0].mxu0
    %v953 = vadd.f32 0.0, %v952
    %v954 = vpop.f32.mrb[0].mxu0
    %v955 = vpop.f32.mrb[0].mxu0
    %v956 = vadd.f32 0.0, %v955
    %v957 = vpop.f32.mrb[0].mxu0
    %958 = vdwg.mxu0
    %v959 = vpack.c.bf16 %v956, %v953
    %v960 = vld [vmem:[%s1 + $0x90] sm:$0xf]
    %v961 = vld [vmem:[%s1 + $0x94] sm:$0xf]
    %v962 = vld [vmem:[%s1 + $0x98] sm:$0xf]
    %v963 = vld [vmem:[%s1 + $0x9c] sm:$0xf]
    %v964 = vld [vmem:[%s3 + $0x15] sm:$0x1]
    %v965 = vlaneseq
    %v966 = vshrl.u32 %v965, 7
    %v967 = vsub.s32 0, %v966
    %v968 = vrot.slane %v964, %v967
    %v973 = vunpack.c.l.b16 %v960
    %v974 = vunpack.c.l.b16 %v961
    %v975 = vunpack.c.l.b16 %v962
    %v976 = vunpack.c.l.b16 %v963
    %v977 = vpack.c.b16 %v974, %v973
    %v978 = vpack.c.b16 %v976, %v975
    %v982 = vsel %vm321, %v959, 0
    %984 = vmatprep.subr.bf16.mxu0 0
    %985 = vmatpush1.bf16.msra.mxu0 %v977
    %986 = vmatprep.subr.bf16.mxu0 0
    %987 = vmatpush1.bf16.msra.mxu0 %v978
    %988 = vmatprep.subr.bf16.mxu0 0
    %989 = vmatpush1.bf16.msra.mxu0 0
    %990 = vmatprep.subr.bf16.mxu0 0
    %991 = vmatpush1.bf16.msra.mxu0 0
    %992 = vmatprep.subr.bf16.mxu0 0
    %993 = vmatpush1.bf16.msra.mxu0 0
    %994 = vmatprep.subr.bf16.mxu0 0
    %995 = vmatpush1.bf16.msra.mxu0 0
    %996 = vmatprep.subr.bf16.mxu0 0
    %997 = vmatpush1.bf16.msra.mxu0 0
    %998 = vmatprep.subr.bf16.mxu0 0
    %999 = vmatpush1.bf16.msra.mxu0 0
    %1000 = vmatprep.subr.bf16.mxu0 0
    %1001 = vmatpush1.bf16.msra.mxu0 0
    %1002 = vmatprep.subr.bf16.mxu0 0
    %1003 = vmatpush1.bf16.msra.mxu0 0
    %1004 = vmatprep.subr.bf16.mxu0 0
    %1005 = vmatpush1.bf16.msra.mxu0 0
    %1006 = vmatprep.subr.bf16.mxu0 0
    %1007 = vmatpush1.bf16.msra.mxu0 0
    %1008 = vmatprep.subr.bf16.mxu0 0
    %1009 = vmatpush1.bf16.msra.mxu0 0
    %1010 = vmatprep.subr.bf16.mxu0 0
    %1011 = vmatpush1.bf16.msra.mxu0 0
    %1012 = vmatprep.subr.bf16.mxu0 0
    %1013 = vmatpush1.bf16.msra.mxu0 0
    %1014 = vmatprep.subr.bf16.mxu0 0
    %1015 = vmatpush1.bf16.msra.mxu0 0
    %1016 = vmatprep.mubr.bf16.mxu0 0
    %1017 = vmatmul.mubr.bf16.gmra.mrb[0].mxu0 %v982
    %v1018 = vpop.f32.mrb[0].mxu0
    %v1019 = vadd.f32 %v968, %v1018
    %v1020 = vpop.f32.mrb[0].mxu0
    %v1021 = vpop.f32.mrb[0].mxu0
    %v1022 = vadd.f32 %v968, %v1021
    %v1023 = vpop.f32.mrb[0].mxu0
    %1024 = vdwg.mxu0
    %v1025 = vadd.f32 %v175, %v1019
    %v1026 = vadd.f32 %v180, %v1022
    %v1027 = vld [vmem:[%s3 + $0x16] sm:$0x1]
    %v1028 = vld [vmem:[%s3 + $0x17] sm:$0x1]
    %v1029 = vsel %vm321, %v1025, 0.0
    %1030 = vadd.xlane.f32.xlu0 %v1029
    %v1031 = vpop.xlane.xlu0 %1030
    %v1032 = vsel %vm325, %v1026, 0.0
    %1033 = vadd.xlane.f32.xlu0 %v1032
    %v1034 = vpop.xlane.xlu0 %1033
    %v1035 = vmul.f32 %v1031, %v329
    %v1036 = vmul.f32 %v1034, %v329
    %v1037 = vsub.f32 %v1025, %v1035
    %v1038 = vsub.f32 %v1026, %v1036
    %v1039 = vmul.f32 %v1037, %v1037
    %v1040 = vmul.f32 %v1038, %v1038
    %v1041 = vsel %vm321, %v1039, 0.0
    %1042 = vadd.xlane.f32.xlu0 %v1041
    %v1043 = vpop.xlane.xlu0 %1042
    %v1044 = vsel %vm325, %v1040, 0.0
    %1045 = vadd.xlane.f32.xlu0 %v1044
    %v1046 = vpop.xlane.xlu0 %1045
    %v1047 = vmul.f32 %v1043, %v329
    %v1048 = vmul.f32 %v1046, %v329
    %v1049 = vadd.f32 %v1047, 1e-06
    %v1050 = vadd.f32 %v1048, 1e-06
    %v1051 = vrsqrt.pop %v1049
    %v1052 = vrsqrt.pop %v1050
    %v1053 = vmul.f32 %v1037, %v1051
    %v1054 = vmul.f32 %v1038, %v1052
    %v1055 = vlaneseq
    %v1056 = vshrl.u32 %v1055, 7
    %v1057 = vsub.s32 0, %v1056
    %v1058 = vrot.slane %v1027, %v1057
    %v1059 = vmul.f32 %v1053, %v1058
    %v1060 = vmul.f32 %v1054, %v1058
    %v1061 = vlaneseq
    %v1062 = vshrl.u32 %v1061, 7
    %v1063 = vsub.s32 0, %v1062
    %v1064 = vrot.slane %v1028, %v1063
    %v1065 = vadd.f32 %v1059, %v1064
    %v1066 = vadd.f32 %v1060, %v1064
    %v1067 = vpack.c.bf16 %v1066, %v1065
    %v1068 = vld [vmem:[%s2] sm:$0xf]
    %v1069 = vld [vmem:[%s2 + $0x4] sm:$0xf]
    %v1070 = vld [vmem:[%s2 + $0x8] sm:$0xf]
    %v1071 = vld [vmem:[%s2 + $0xc] sm:$0xf]
    %v1072 = vld [vmem:[%s4] sm:$0x1]
    %v1073 = vlaneseq
    %v1074 = vshrl.u32 %v1073, 7
    %v1075 = vsub.s32 0, %v1074
    %v1076 = vrot.slane %v1072, %v1075
    %v1081 = vunpack.c.l.b16 %v1068
    %v1082 = vunpack.c.l.b16 %v1069
    %v1083 = vunpack.c.l.b16 %v1070
    %v1084 = vunpack.c.l.b16 %v1071
    %v1085 = vpack.c.b16 %v1082, %v1081
    %v1086 = vpack.c.b16 %v1084, %v1083
    %v1090 = vsel %vm321, %v1067, 0
    %1092 = vmatprep.subr.bf16.mxu0 0
    %1093 = vmatpush1.bf16.msra.mxu0 %v1085
    %1094 = vmatprep.subr.bf16.mxu0 0
    %1095 = vmatpush1.bf16.msra.mxu0 %v1086
    %1096 = vmatprep.subr.bf16.mxu0 0
    %1097 = vmatpush1.bf16.msra.mxu0 0
    %1098 = vmatprep.subr.bf16.mxu0 0
    %1099 = vmatpush1.bf16.msra.mxu0 0
    %1100 = vmatprep.subr.bf16.mxu0 0
    %1101 = vmatpush1.bf16.msra.mxu0 0
    %1102 = vmatprep.subr.bf16.mxu0 0
    %1103 = vmatpush1.bf16.msra.mxu0 0
    %1104 = vmatprep.subr.bf16.mxu0 0
    %1105 = vmatpush1.bf16.msra.mxu0 0
    %1106 = vmatprep.subr.bf16.mxu0 0
    %1107 = vmatpush1.bf16.msra.mxu0 0
    %1108 = vmatprep.subr.bf16.mxu0 0
    %1109 = vmatpush1.bf16.msra.mxu0 0
    %1110 = vmatprep.subr.bf16.mxu0 0
    %1111 = vmatpush1.bf16.msra.mxu0 0
    %1112 = vmatprep.subr.bf16.mxu0 0
    %1113 = vmatpush1.bf16.msra.mxu0 0
    %1114 = vmatprep.subr.bf16.mxu0 0
    %1115 = vmatpush1.bf16.msra.mxu0 0
    %1116 = vmatprep.subr.bf16.mxu0 0
    %1117 = vmatpush1.bf16.msra.mxu0 0
    %1118 = vmatprep.subr.bf16.mxu0 0
    %1119 = vmatpush1.bf16.msra.mxu0 0
    %1120 = vmatprep.subr.bf16.mxu0 0
    %1121 = vmatpush1.bf16.msra.mxu0 0
    %1122 = vmatprep.subr.bf16.mxu0 0
    %1123 = vmatpush1.bf16.msra.mxu0 0
    %1124 = vmatprep.mubr.bf16.mxu0 0
    %1125 = vmatmul.mubr.bf16.gmra.mrb[0].mxu0 %v1090
    %v1126 = vpop.f32.mrb[0].mxu0
    %v1127 = vadd.f32 %v1076, %v1126
    %v1128 = vpop.f32.mrb[0].mxu0
    %v1129 = vpop.f32.mrb[0].mxu0
    %v1130 = vadd.f32 %v1076, %v1129
    %v1131 = vpop.f32.mrb[0].mxu0
    %1132 = vdwg.mxu0
    %v1133 = vmul.f32 %v1127, 0.5
    %v1134 = vmul.f32 %v1130, 0.5
    %v1135 = vmul.f32 %v1127, 0.044715
    %v1136 = vmul.f32 %v1130, 0.044715
    %v1137 = vmul.f32 %v1135, %v1127
    %v1138 = vmul.f32 %v1136, %v1130
    %v1139 = vmul.f32 %v1137, %v1127
    %v1140 = vmul.f32 %v1138, %v1130
    %v1141 = vadd.f32 %v1127, %v1139
    %v1142 = vadd.f32 %v1130, %v1140
    %v1143 = vmul.f32 %v1141, 0.7978846
    %v1144 = vmul.f32 %v1142, 0.7978846
    %v1145 = vtanh.pop %v1143
    %v1146 = vtanh.pop %v1144
    %v1147 = vadd.f32 %v1145, 1.0
    %v1148 = vadd.f32 %v1146, 1.0
    %v1149 = vmul.f32 %v1133, %v1147
    %v1150 = vmul.f32 %v1134, %v1148
    %v1151 = vpack.c.bf16 %v1150, %v1149
    %v1152 = vld [vmem:[%s1 + $0xa0] sm:$0xf]
    %v1153 = vld [vmem:[%s1 + $0xa4] sm:$0xf]
    %v1154 = vld [vmem:[%s1 + $0xa8] sm:$0xf]
    %v1155 = vld [vmem:[%s1 + $0xac] sm:$0xf]
    %v1156 = vld [vmem:[%s1 + $0xb0] sm:$0xf]
    %v1157 = vld [vmem:[%s1 + $0xb4] sm:$0xf]
    %v1158 = vld [vmem:[%s1 + $0xb8] sm:$0xf]
    %v1159 = vld [vmem:[%s1 + $0xbc] sm:$0xf]
    %v1160 = vld [vmem:[%s1 + $0xc0] sm:$0xf]
    %v1161 = vld [vmem:[%s1 + $0xc4] sm:$0xf]
    %v1162 = vld [vmem:[%s1 + $0xc8] sm:$0xf]
    %v1163 = vld [vmem:[%s1 + $0xcc] sm:$0xf]
    %v1164 = vld [vmem:[%s1 + $0xd0] sm:$0xf]
    %v1165 = vld [vmem:[%s1 + $0xd4] sm:$0xf]
    %v1166 = vld [vmem:[%s1 + $0xd8] sm:$0xf]
    %v1167 = vld [vmem:[%s1 + $0xdc] sm:$0xf]
    %v1168 = vld [vmem:[%s3 + $0x18] sm:$0x1]
    %v1169 = vlaneseq
    %v1170 = vshrl.u32 %v1169, 7
    %v1171 = vsub.s32 0, %v1170
    %v1172 = vrot.slane %v1168, %v1171
    %v1189 = vunpack.c.l.b16 %v1152
    %v1190 = vunpack.c.l.b16 %v1153
    %v1191 = vunpack.c.l.b16 %v1154
    %v1192 = vunpack.c.l.b16 %v1155
    %v1193 = vunpack.c.l.b16 %v1156
    %v1194 = vunpack.c.l.b16 %v1157
    %v1195 = vunpack.c.l.b16 %v1158
    %v1196 = vunpack.c.l.b16 %v1159
    %v1197 = vunpack.c.l.b16 %v1160
    %v1198 = vunpack.c.l.b16 %v1161
    %v1199 = vunpack.c.l.b16 %v1162
    %v1200 = vunpack.c.l.b16 %v1163
    %v1201 = vunpack.c.l.b16 %v1164
    %v1202 = vunpack.c.l.b16 %v1165
    %v1203 = vunpack.c.l.b16 %v1166
    %v1204 = vunpack.c.l.b16 %v1167
    %v1205 = vpack.c.b16 %v1190, %v1189
    %v1206 = vpack.c.b16 %v1192, %v1191
    %v1207 = vpack.c.b16 %v1194, %v1193
    %v1208 = vpack.c.b16 %v1196, %v1195
    %v1209 = vpack.c.b16 %v1198, %v1197
    %v1210 = vpack.c.b16 %v1200, %v1199
    %v1211 = vpack.c.b16 %v1202, %v1201
    %v1212 = vpack.c.b16 %v1204, %v1203
    %1221 = vmatprep.subr.bf16.mxu0 0
    %1222 = vmatpush1.bf16.msra.mxu0 %v1205
    %1223 = vmatprep.subr.bf16.mxu0 0
    %1224 = vmatpush1.bf16.msra.mxu0 %v1206
    %1225 = vmatprep.subr.bf16.mxu0 0
    %1226 = vmatpush1.bf16.msra.mxu0 %v1207
    %1227 = vmatprep.subr.bf16.mxu0 0
    %1228 = vmatpush1.bf16.msra.mxu0 %v1208
    %1229 = vmatprep.subr.bf16.mxu0 0
    %1230 = vmatpush1.bf16.msra.mxu0 %v1209
    %1231 = vmatprep.subr.bf16.mxu0 0
    %1232 = vmatpush1.bf16.msra.mxu0 %v1210
    %1233 = vmatprep.subr.bf16.mxu0 0
    %1234 = vmatpush1.bf16.msra.mxu0 %v1211
    %1235 = vmatprep.subr.bf16.mxu0 0
    %1236 = vmatpush1.bf16.msra.mxu0 %v1212
    %1237 = vmatprep.subr.bf16.mxu0 0
    %1238 = vmatpush1.bf16.msra.mxu0 0
    %1239 = vmatprep.subr.bf16.mxu0 0
    %1240 = vmatpush1.bf16.msra.mxu0 0
    %1241 = vmatprep.subr.bf16.mxu0 0
    %1242 = vmatpush1.bf16.msra.mxu0 0
    %1243 = vmatprep.subr.bf16.mxu0 0
    %1244 = vmatpush1.bf16.msra.mxu0 0
    %1245 = vmatprep.subr.bf16.mxu0 0
    %1246 = vmatpush1.bf16.msra.mxu0 0
    %1247 = vmatprep.subr.bf16.mxu0 0
    %1248 = vmatpush1.bf16.msra.mxu0 0
    %1249 = vmatprep.subr.bf16.mxu0 0
    %1250 = vmatpush1.bf16.msra.mxu0 0
    %1251 = vmatprep.subr.bf16.mxu0 0
    %1252 = vmatpush1.bf16.msra.mxu0 0
    %1253 = vmatprep.mubr.bf16.mxu0 0
    %1254 = vmatmul.mubr.bf16.gmra.mrb[0].mxu0 %v1151
    %v1255 = vpop.f32.mrb[0].mxu0
    %v1256 = vadd.f32 %v1172, %v1255
    %v1257 = vpop.f32.mrb[0].mxu0
    %v1258 = vpop.f32.mrb[0].mxu0
    %v1259 = vadd.f32 %v1172, %v1258
    %v1260 = vpop.f32.mrb[0].mxu0
    %1261 = vdwg.mxu0
    %v1262 = vadd.f32 %v1025, %v1256
    %v1263 = vadd.f32 %v1026, %v1259
    %v1264 = vld [vmem:[%s3 + $0x20] sm:$0x1]
    %v1265 = vld [vmem:[%s3 + $0x21] sm:$0x1]
    %v1266 = vsel %vm321, %v1262, 0.0
    %1267 = vadd.xlane.f32.xlu0 %v1266
    %v1268 = vpop.xlane.xlu0 %1267
    %v1269 = vsel %vm325, %v1263, 0.0
    %1270 = vadd.xlane.f32.xlu0 %v1269
    %v1271 = vpop.xlane.xlu0 %1270
    %v1272 = vmul.f32 %v1268, %v329
    %v1273 = vmul.f32 %v1271, %v329
    %v1274 = vsub.f32 %v1262, %v1272
    %v1275 = vsub.f32 %v1263, %v1273
    %v1276 = vmul.f32 %v1274, %v1274
    %v1277 = vmul.f32 %v1275, %v1275
    %v1278 = vsel %vm321, %v1276, 0.0
    %1279 = vadd.xlane.f32.xlu0 %v1278
    %v1280 = vpop.xlane.xlu0 %1279
    %v1281 = vsel %vm325, %v1277, 0.0
    %1282 = vadd.xlane.f32.xlu0 %v1281
    %v1283 = vpop.xlane.xlu0 %1282
    %v1284 = vmul.f32 %v1280, %v329
    %v1285 = vmul.f32 %v1283, %v329
    %v1286 = vadd.f32 %v1284, 1e-06
    %v1287 = vadd.f32 %v1285, 1e-06
    %v1288 = vrsqrt.pop %v1286
    %v1289 = vrsqrt.pop %v1287
    %v1290 = vmul.f32 %v1274, %v1288
    %v1291 = vmul.f32 %v1275, %v1289
    %v1292 = vlaneseq
    %v1293 = vshrl.u32 %v1292, 7
    %v1294 = vsub.s32 0, %v1293
    %v1295 = vrot.slane %v1264, %v1294
    %v1296 = vmul.f32 %v1290, %v1295
    %v1297 = vmul.f32 %v1291, %v1295
    %v1298 = vlaneseq
    %v1299 = vshrl.u32 %v1298, 7
    %v1300 = vsub.s32 0, %v1299
    %v1301 = vrot.slane %v1265, %v1300
    %v1302 = vadd.f32 %v1296, %v1301
    %v1303 = vadd.f32 %v1297, %v1301
    %v1304 = vpack.c.bf16 %v1303, %v1302
    %v1305 = vld [vmem:[%s1 + $0xe0] sm:$0xf]
    %v1306 = vld [vmem:[%s1 + $0xe4] sm:$0xf]
    %v1307 = vld [vmem:[%s1 + $0xe8] sm:$0xf]
    %v1308 = vld [vmem:[%s1 + $0xec] sm:$0xf]
    %v1309 = vld [vmem:[%s3 + $0x22] sm:$0x1]
    %v1310 = vlaneseq
    %v1311 = vshrl.u32 %v1310, 7
    %v1312 = vsub.s32 0, %v1311
    %v1313 = vrot.slane %v1309, %v1312
    %v1318 = vunpack.c.l.b16 %v1305
    %v1319 = vunpack.c.l.b16 %v1306
    %v1320 = vunpack.c.l.b16 %v1307
    %v1321 = vunpack.c.l.b16 %v1308
    %v1322 = vpack.c.b16 %v1319, %v1318
    %v1323 = vpack.c.b16 %v1321, %v1320
    %v1327 = vsel %vm321, %v1304, 0
    %1329 = vmatprep.subr.bf16.mxu0 0
    %1330 = vmatpush1.bf16.msra.mxu0 %v1322
    %1331 = vmatprep.subr.bf16.mxu0 0
    %1332 = vmatpush1.bf16.msra.mxu0 %v1323
    %1333 = vmatprep.subr.bf16.mxu0 0
    %1334 = vmatpush1.bf16.msra.mxu0 0
    %1335 = vmatprep.subr.bf16.mxu0 0
    %1336 = vmatpush1.bf16.msra.mxu0 0
    %1337 = vmatprep.subr.bf16.mxu0 0
    %1338 = vmatpush1.bf16.msra.mxu0 0
    %1339 = vmatprep.subr.bf16.mxu0 0
    %1340 = vmatpush1.bf16.msra.mxu0 0
    %1341 = vmatprep.subr.bf16.mxu0 0
    %1342 = vmatpush1.bf16.msra.mxu0 0
    %1343 = vmatprep.subr.bf16.mxu0 0
    %1344 = vmatpush1.bf16.msra.mxu0 0
    %1345 = vmatprep.subr.bf16.mxu0 0
    %1346 = vmatpush1.bf16.msra.mxu0 0
    %1347 = vmatprep.subr.bf16.mxu0 0
    %1348 = vmatpush1.bf16.msra.mxu0 0
    %1349 = vmatprep.subr.bf16.mxu0 0
    %1350 = vmatpush1.bf16.msra.mxu0 0
    %1351 = vmatprep.subr.bf16.mxu0 0
    %1352 = vmatpush1.bf16.msra.mxu0 0
    %1353 = vmatprep.subr.bf16.mxu0 0
    %1354 = vmatpush1.bf16.msra.mxu0 0
    %1355 = vmatprep.subr.bf16.mxu0 0
    %1356 = vmatpush1.bf16.msra.mxu0 0
    %1357 = vmatprep.subr.bf16.mxu0 0
    %1358 = vmatpush1.bf16.msra.mxu0 0
    %1359 = vmatprep.subr.bf16.mxu0 0
    %1360 = vmatpush1.bf16.msra.mxu0 0
    %1361 = vmatprep.mubr.bf16.mxu0 0
    %1362 = vmatmul.mubr.bf16.gmra.mrb[0].mxu0 %v1327
    %v1363 = vpop.f32.mrb[0].mxu0
    %v1364 = vadd.f32 %v1313, %v1363
    %v1365 = vpop.f32.mrb[0].mxu0
    %v1366 = vpop.f32.mrb[0].mxu0
    %v1367 = vadd.f32 %v1313, %v1366
    %v1368 = vpop.f32.mrb[0].mxu0
    %1369 = vdwg.mxu0
    %v1370 = vmul.f32 %v1364, 0.35355338
    %v1371 = vmul.f32 %v1367, 0.35355338
    %v1372 = vld [vmem:[%s1 + $0xf0] sm:$0xf]
    %v1373 = vld [vmem:[%s1 + $0xf4] sm:$0xf]
    %v1374 = vld [vmem:[%s1 + $0xf8] sm:$0xf]
    %v1375 = vld [vmem:[%s1 + $0xfc] sm:$0xf]
    %v1376 = vld [vmem:[%s3 + $0x23] sm:$0x1]
    %v1377 = vlaneseq
    %v1378 = vshrl.u32 %v1377, 7
    %v1379 = vsub.s32 0, %v1378
    %v1380 = vrot.slane %v1376, %v1379
    %v1385 = vunpack.c.l.b16 %v1372
    %v1386 = vunpack.c.l.b16 %v1373
    %v1387 = vunpack.c.l.b16 %v1374
    %v1388 = vunpack.c.l.b16 %v1375
    %v1389 = vpack.c.b16 %v1386, %v1385
    %v1390 = vpack.c.b16 %v1388, %v1387
    %1393 = vmatprep.subr.bf16.mxu0 0
    %1394 = vmatpush1.bf16.msra.mxu0 %v1389
    %1395 = vmatprep.subr.bf16.mxu0 0
    %1396 = vmatpush1.bf16.msra.mxu0 %v1390
    %1397 = vmatprep.subr.bf16.mxu0 0
    %1398 = vmatpush1.bf16.msra.mxu0 0
    %1399 = vmatprep.subr.bf16.mxu0 0
    %1400 = vmatpush1.bf16.msra.mxu0 0
    %1401 = vmatprep.subr.bf16.mxu0 0
    %1402 = vmatpush1.bf16.msra.mxu0 0
    %1403 = vmatprep.subr.bf16.mxu0 0
    %1404 = vmatpush1.bf16.msra.mxu0 0
    %1405 = vmatprep.subr.bf16.mxu0 0
    %1406 = vmatpush1.bf16.msra.mxu0 0
    %1407 = vmatprep.subr.bf16.mxu0 0
    %1408 = vmatpush1.bf16.msra.mxu0 0
    %1409 = vmatprep.subr.bf16.mxu0 0
    %1410 = vmatpush1.bf16.msra.mxu0 0
    %1411 = vmatprep.subr.bf16.mxu0 0
    %1412 = vmatpush1.bf16.msra.mxu0 0
    %1413 = vmatprep.subr.bf16.mxu0 0
    %1414 = vmatpush1.bf16.msra.mxu0 0
    %1415 = vmatprep.subr.bf16.mxu0 0
    %1416 = vmatpush1.bf16.msra.mxu0 0
    %1417 = vmatprep.subr.bf16.mxu0 0
    %1418 = vmatpush1.bf16.msra.mxu0 0
    %1419 = vmatprep.subr.bf16.mxu0 0
    %1420 = vmatpush1.bf16.msra.mxu0 0
    %1421 = vmatprep.subr.bf16.mxu0 0
    %1422 = vmatpush1.bf16.msra.mxu0 0
    %1423 = vmatprep.subr.bf16.mxu0 0
    %1424 = vmatpush1.bf16.msra.mxu0 0
    %1425 = vmatprep.mubr.bf16.mxu0 0
    %1426 = vmatmul.mubr.bf16.gmra.mrb[0].mxu0 %v1327
    %v1427 = vpop.f32.mrb[0].mxu0
    %v1428 = vadd.f32 %v1380, %v1427
    %v1429 = vpop.f32.mrb[0].mxu0
    %v1430 = vpop.f32.mrb[0].mxu0
    %v1431 = vadd.f32 %v1380, %v1430
    %v1432 = vpop.f32.mrb[0].mxu0
    %1433 = vdwg.mxu0
    %v1434 = vld [vmem:[%s1 + $0x100] sm:$0xf]
    %v1435 = vld [vmem:[%s1 + $0x104] sm:$0xf]
    %v1436 = vld [vmem:[%s1 + $0x108] sm:$0xf]
    %v1437 = vld [vmem:[%s1 + $0x10c] sm:$0xf]
    %v1438 = vld [vmem:[%s3 + $0x24] sm:$0x1]
    %v1439 = vlaneseq
    %v1440 = vshrl.u32 %v1439, 7
    %v1441 = vsub.s32 0, %v1440
    %v1442 = vrot.slane %v1438, %v1441
    %v1447 = vunpack.c.l.b16 %v1434
    %v1448 = vunpack.c.l.b16 %v1435
    %v1449 = vunpack.c.l.b16 %v1436
    %v1450 = vunpack.c.l.b16 %v1437
    %v1451 = vpack.c.b16 %v1448, %v1447
    %v1452 = vpack.c.b16 %v1450, %v1449
    %1455 = vmatprep.subr.bf16.mxu0 0
    %1456 = vmatpush1.bf16.msra.mxu0 %v1451
    %1457 = vmatprep.subr.bf16.mxu0 0
    %1458 = vmatpush1.bf16.msra.mxu0 %v1452
    %1459 = vmatprep.subr.bf16.mxu0 0
    %1460 = vmatpush1.bf16.msra.mxu0 0
    %1461 = vmatprep.subr.bf16.mxu0 0
    %1462 = vmatpush1.bf16.msra.mxu0 0
    %1463 = vmatprep.subr.bf16.mxu0 0
    %1464 = vmatpush1.bf16.msra.mxu0 0
    %1465 = vmatprep.subr.bf16.mxu0 0
    %1466 = vmatpush1.bf16.msra.mxu0 0
    %1467 = vmatprep.subr.bf16.mxu0 0
    %1468 = vmatpush1.bf16.msra.mxu0 0
    %1469 = vmatprep.subr.bf16.mxu0 0
    %1470 = vmatpush1.bf16.msra.mxu0 0
    %1471 = vmatprep.subr.bf16.mxu0 0
    %1472 = vmatpush1.bf16.msra.mxu0 0
    %1473 = vmatprep.subr.bf16.mxu0 0
    %1474 = vmatpush1.bf16.msra.mxu0 0
    %1475 = vmatprep.subr.bf16.mxu0 0
    %1476 = vmatpush1.bf16.msra.mxu0 0
    %1477 = vmatprep.subr.bf16.mxu0 0
    %1478 = vmatpush1.bf16.msra.mxu0 0
    %1479 = vmatprep.subr.bf16.mxu0 0
    %1480 = vmatpush1.bf16.msra.mxu0 0
    %1481 = vmatprep.subr.bf16.mxu0 0
    %1482 = vmatpush1.bf16.msra.mxu0 0
    %1483 = vmatprep.subr.bf16.mxu0 0
    %1484 = vmatpush1.bf16.msra.mxu0 0
    %1485 = vmatprep.subr.bf16.mxu0 0
    %1486 = vmatpush1.bf16.msra.mxu0 0
    %1487 = vmatprep.mubr.bf16.mxu0 0
    %1488 = vmatmul.mubr.bf16.gmra.mrb[0].mxu0 %v1327
    %v1489 = vpop.f32.mrb[0].mxu0
    %v1490 = vadd.f32 %v1442, %v1489
    %v1491 = vpop.f32.mrb[0].mxu0
    %v1492 = vpop.f32.mrb[0].mxu0
    %v1493 = vadd.f32 %v1442, %v1492
    %v1494 = vpop.f32.mrb[0].mxu0
    %1495 = vdwg.mxu0
    %v1496 = vpack.c.bf16 %v1371, %v1370
    %v1498 = vsel %vm568, %v1496, 0
    %1500 = vmatprep.subr.bf16.mxu0 0
    %1501 = vmatpush1.bf16.msra.mxu0 %v1498
    %1502 = vmatprep.subr.bf16.mxu0 0
    %1503 = vmatpush1.bf16.msra.mxu0 0
    %1504 = vmatprep.subr.bf16.mxu0 0
    %1505 = vmatpush1.bf16.msra.mxu0 0
    %1506 = vmatprep.subr.bf16.mxu0 0
    %1507 = vmatpush1.bf16.msra.mxu0 0
    %1508 = vmatprep.subr.bf16.mxu0 0
    %1509 = vmatpush1.bf16.msra.mxu0 0
    %1510 = vmatprep.subr.bf16.mxu0 0
    %1511 = vmatpush1.bf16.msra.mxu0 0
    %1512 = vmatprep.subr.bf16.mxu0 0
    %1513 = vmatpush1.bf16.msra.mxu0 0
    %1514 = vmatprep.subr.bf16.mxu0 0
    %1515 = vmatpush1.bf16.msra.mxu0 0
    %1516 = vmatprep.subr.bf16.mxu0 0
    %1517 = vmatpush1.bf16.msra.mxu0 0
    %1518 = vmatprep.subr.bf16.mxu0 0
    %1519 = vmatpush1.bf16.msra.mxu0 0
    %1520 = vmatprep.subr.bf16.mxu0 0
    %1521 = vmatpush1.bf16.msra.mxu0 0
    %1522 = vmatprep.subr.bf16.mxu0 0
    %1523 = vmatpush1.bf16.msra.mxu0 0
    %1524 = vmatprep.subr.bf16.mxu0 0
    %1525 = vmatpush1.bf16.msra.mxu0 0
    %1526 = vmatprep.subr.bf16.mxu0 0
    %1527 = vmatpush1.bf16.msra.mxu0 0
    %1528 = vmatprep.subr.bf16.mxu0 0
    %1529 = vmatpush1.bf16.msra.mxu0 0
    %1530 = vmatprep.subr.bf16.mxu0 0
    %1531 = vmatpush1.bf16.msra.mxu0 0
    %1532 = vmatprep.mubr.bf16.mxu0 0
    %1533 = vmatmul.mubr.bf16.gmra.mrb[0].mxu0 %v557
    %v1534 = vpop.f32.mrb[0].mxu0
    %v1535 = vadd.f32 0.0, %v1534
    %v1536 = vpop.f32.mrb[0].mxu0
    %v1537 = vpop.f32.mrb[0].mxu0
    %v1538 = vadd.f32 0.0, %v1537
    %v1539 = vpop.f32.mrb[0].mxu0
    %1540 = vmatprep.mubr.bf16.mxu0 0
    %1541 = vmatmul.mubr.bf16.gmra.mrb[0].mxu0 %v560
    %v1542 = vpop.f32.mrb[0].mxu0
    %v1543 = vadd.f32 0.0, %v1542
    %v1544 = vpop.f32.mrb[0].mxu0
    %v1545 = vpop.f32.mrb[0].mxu0
    %v1546 = vadd.f32 0.0, %v1545
    %v1547 = vpop.f32.mrb[0].mxu0
    %1548 = vmatprep.mubr.bf16.mxu0 0
    %1549 = vmatmul.mubr.bf16.gmra.mrb[0].mxu0 %v563
    %v1550 = vpop.f32.mrb[0].mxu0
    %v1551 = vadd.f32 0.0, %v1550
    %v1552 = vpop.f32.mrb[0].mxu0
    %v1553 = vpop.f32.mrb[0].mxu0
    %v1554 = vadd.f32 0.0, %v1553
    %v1555 = vpop.f32.mrb[0].mxu0
    %1556 = vmatprep.mubr.bf16.mxu0 0
    %1557 = vmatmul.mubr.bf16.gmra.mrb[0].mxu0 %v566
    %v1558 = vpop.f32.mrb[0].mxu0
    %v1559 = vadd.f32 0.0, %v1558
    %v1560 = vpop.f32.mrb[0].mxu0
    %v1561 = vpop.f32.mrb[0].mxu0
    %v1562 = vadd.f32 0.0, %v1561
    %v1563 = vpop.f32.mrb[0].mxu0
    %1564 = vdwg.mxu0
    %v1565 = vmul.f32 %v1535, %v311
    %v1566 = vmul.f32 %v1538, %v312
    %v1567 = vmul.f32 %v1543, %v313
    %v1568 = vmul.f32 %v1546, %v314
    %v1569 = vmul.f32 %v1551, %v315
    %v1570 = vmul.f32 %v1554, %v316
    %v1571 = vmul.f32 %v1559, %v317
    %v1572 = vmul.f32 %v1562, %v318
    %v1573 = vpack.c.bf16 %v1566, %v1565
    %v1574 = vpack.c.bf16 %v1568, %v1567
    %v1575 = vpack.c.bf16 %v1570, %v1569
    %v1576 = vpack.c.bf16 %v1572, %v1571
    %v1577 = vpack.c.bf16 %v1431, %v1428
    %v1579 = vsel %vm321, %v1573, 0
    %v1582 = vsel %vm321, %v1574, 0
    %v1585 = vsel %vm321, %v1575, 0
    %v1588 = vsel %vm321, %v1576, 0
    %v1591 = vsel %vm321, %v1577, 0
    %1593 = vmatprep.subr.bf16.mxu0 0
    %1594 = vmatpush1.bf16.xpose.msra.mxu0 %v1591
    %1595 = vmatprep.subr.bf16.mxu0 0
    %1596 = vmatpush1.bf16.xpose.msra.mxu0 0
    %1597 = vmatprep.subr.bf16.mxu0 0
    %1598 = vmatpush1.bf16.xpose.msra.mxu0 0
    %1599 = vmatprep.subr.bf16.mxu0 0
    %1600 = vmatpush1.bf16.xpose.msra.mxu0 0
    %1601 = vmatprep.subr.bf16.mxu0 0
    %1602 = vmatpush1.bf16.xpose.msra.mxu0 0
    %1603 = vmatprep.subr.bf16.mxu0 0
    %1604 = vmatpush1.bf16.xpose.msra.mxu0 0
    %1605 = vmatprep.subr.bf16.mxu0 0
    %1606 = vmatpush1.bf16.xpose.msra.mxu0 0
    %1607 = vmatprep.subr.bf16.mxu0 0
    %1608 = vmatpush1.bf16.xpose.msra.mxu0 0
    %1609 = vmatprep.subr.bf16.mxu0 0
    %1610 = vmatpush1.bf16.xpose.msra.mxu0 0
    %1611 = vmatprep.subr.bf16.mxu0 0
    %1612 = vmatpush1.bf16.xpose.msra.mxu0 0
    %1613 = vmatprep.subr.bf16.mxu0 0
    %1614 = vmatpush1.bf16.xpose.msra.mxu0 0
    %1615 = vmatprep.subr.bf16.mxu0 0
    %1616 = vmatpush1.bf16.xpose.msra.mxu0 0
    %1617 = vmatprep.subr.bf16.mxu0 0
    %1618 = vmatpush1.bf16.xpose.msra.mxu0 0
    %1619 = vmatprep.subr.bf16.mxu0 0
    %1620 = vmatpush1.bf16.xpose.msra.mxu0 0
    %1621 = vmatprep.subr.bf16.mxu0 0
    %1622 = vmatpush1.bf16.xpose.msra.mxu0 0
    %1623 = vmatprep.subr.bf16.mxu0 0
    %1624 = vmatpush1.bf16.xpose.msra.mxu0 0
    %1625 = vmatprep.mubr.bf16.mxu0 0
    %1626 = vmatmul.mubr.bf16.gmra.mrb[0].mxu0 %v1579
    %v1627 = vpop.f32.mrb[0].mxu0
    %v1628 = vadd.f32 %v280, %v1627
    %v1629 = vpop.f32.mrb[0].mxu0
    %v1630 = vpop.f32.mrb[0].mxu0
    %v1631 = vadd.f32 %v281, %v1630
    %v1632 = vpop.f32.mrb[0].mxu0
    %1633 = vmatprep.mubr.bf16.mxu0 0
    %1634 = vmatmul.mubr.bf16.gmra.mrb[0].mxu0 %v1582
    %v1635 = vpop.f32.mrb[0].mxu0
    %v1636 = vadd.f32 %v282, %v1635
    %v1637 = vpop.f32.mrb[0].mxu0
    %v1638 = vpop.f32.mrb[0].mxu0
    %v1639 = vadd.f32 %v283, %v1638
    %v1640 = vpop.f32.mrb[0].mxu0
    %1641 = vmatprep.mubr.bf16.mxu0 0
    %1642 = vmatmul.mubr.bf16.gmra.mrb[0].mxu0 %v1585
    %v1643 = vpop.f32.mrb[0].mxu0
    %v1644 = vadd.f32 %v284, %v1643
    %v1645 = vpop.f32.mrb[0].mxu0
    %v1646 = vpop.f32.mrb[0].mxu0
    %v1647 = vadd.f32 %v285, %v1646
    %v1648 = vpop.f32.mrb[0].mxu0
    %1649 = vmatprep.mubr.bf16.mxu0 0
    %1650 = vmatmul.mubr.bf16.gmra.mrb[0].mxu0 %v1588
    %v1651 = vpop.f32.mrb[0].mxu0
    %v1652 = vadd.f32 %v286, %v1651
    %v1653 = vpop.f32.mrb[0].mxu0
    %v1654 = vpop.f32.mrb[0].mxu0
    %v1655 = vadd.f32 %v287, %v1654
    %v1656 = vpop.f32.mrb[0].mxu0
    %1657 = vdwg.mxu0
    %v1658 = vsel %vm555, %v1628, -inf
    %1659 = vmax.xlane.f32.xlu0 %v1658
    %v1660 = vpop.xlane.xlu0 %1659
    %v1661 = vsel %vm555, %v1631, -inf
    %1662 = vmax.xlane.f32.xlu0 %v1661
    %v1663 = vpop.xlane.xlu0 %1662
    %v1664 = vsel %vm555, %v1636, -inf
    %1665 = vmax.xlane.f32.xlu0 %v1664
    %v1666 = vpop.xlane.xlu0 %1665
    %v1667 = vsel %vm555, %v1639, -inf
    %1668 = vmax.xlane.f32.xlu0 %v1667
    %v1669 = vpop.xlane.xlu0 %1668
    %v1670 = vsel %vm555, %v1644, -inf
    %1671 = vmax.xlane.f32.xlu0 %v1670
    %v1672 = vpop.xlane.xlu0 %1671
    %v1673 = vsel %vm555, %v1647, -inf
    %1674 = vmax.xlane.f32.xlu0 %v1673
    %v1675 = vpop.xlane.xlu0 %1674
    %v1676 = vsel %vm555, %v1652, -inf
    %1677 = vmax.xlane.f32.xlu0 %v1676
    %v1678 = vpop.xlane.xlu0 %1677
    %v1679 = vsel %vm555, %v1655, -inf
    %1680 = vmax.xlane.f32.xlu0 %v1679
    %v1681 = vpop.xlane.xlu0 %1680
    %v1682 = vsub.f32 %v1628, %v1660
    %v1683 = vsub.f32 %v1631, %v1663
    %v1684 = vsub.f32 %v1636, %v1666
    %v1685 = vsub.f32 %v1639, %v1669
    %v1686 = vsub.f32 %v1644, %v1672
    %v1687 = vsub.f32 %v1647, %v1675
    %v1688 = vsub.f32 %v1652, %v1678
    %v1689 = vsub.f32 %v1655, %v1681
    %v1690 = vmul.f32 %v1682, 1.442695
    %v1691 = vpow.pop %v1690
    %v1692 = vmul.f32 %v1683, 1.442695
    %v1693 = vpow.pop %v1692
    %v1694 = vmul.f32 %v1684, 1.442695
    %v1695 = vpow.pop %v1694
    %v1696 = vmul.f32 %v1685, 1.442695
    %v1697 = vpow.pop %v1696
    %v1698 = vmul.f32 %v1686, 1.442695
    %v1699 = vpow.pop %v1698
    %v1700 = vmul.f32 %v1687, 1.442695
    %v1701 = vpow.pop %v1700
    %v1702 = vmul.f32 %v1688, 1.442695
    %v1703 = vpow.pop %v1702
    %v1704 = vmul.f32 %v1689, 1.442695
    %v1705 = vpow.pop %v1704
    %v1706 = vsel %vm555, %v1691, 0.0
    %1707 = vadd.xlane.f32.xlu0 %v1706
    %v1708 = vpop.xlane.xlu0 %1707
    %v1709 = vsel %vm555, %v1693, 0.0
    %1710 = vadd.xlane.f32.xlu0 %v1709
    %v1711 = vpop.xlane.xlu0 %1710
    %v1712 = vsel %vm555, %v1695, 0.0
    %1713 = vadd.xlane.f32.xlu0 %v1712
    %v1714 = vpop.xlane.xlu0 %1713
    %v1715 = vsel %vm555, %v1697, 0.0
    %1716 = vadd.xlane.f32.xlu0 %v1715
    %v1717 = vpop.xlane.xlu0 %1716
    %v1718 = vsel %vm555, %v1699, 0.0
    %1719 = vadd.xlane.f32.xlu0 %v1718
    %v1720 = vpop.xlane.xlu0 %1719
    %v1721 = vsel %vm555, %v1701, 0.0
    %1722 = vadd.xlane.f32.xlu0 %v1721
    %v1723 = vpop.xlane.xlu0 %1722
    %v1724 = vsel %vm555, %v1703, 0.0
    %1725 = vadd.xlane.f32.xlu0 %v1724
    %v1726 = vpop.xlane.xlu0 %1725
    %v1727 = vsel %vm555, %v1705, 0.0
    %1728 = vadd.xlane.f32.xlu0 %v1727
    %v1729 = vpop.xlane.xlu0 %1728
    %v1730 = vrcp.pop %v1708
    %v1731 = vrcp.pop %v1711
    %v1732 = vrcp.pop %v1714
    %v1733 = vrcp.pop %v1717
    %v1734 = vrcp.pop %v1720
    %v1735 = vrcp.pop %v1723
    %v1736 = vrcp.pop %v1726
    %v1737 = vrcp.pop %v1729
    %v1738 = vmul.f32 %v1691, %v1730
    %v1739 = vmul.f32 %v1693, %v1731
    %v1740 = vmul.f32 %v1695, %v1732
    %v1741 = vmul.f32 %v1697, %v1733
    %v1742 = vmul.f32 %v1699, %v1734
    %v1743 = vmul.f32 %v1701, %v1735
    %v1744 = vmul.f32 %v1703, %v1736
    %v1745 = vmul.f32 %v1705, %v1737
    %v1746 = vpack.c.bf16 %v1739, %v1738
    %v1747 = vpack.c.bf16 %v1741, %v1740
    %v1748 = vpack.c.bf16 %v1743, %v1742
    %v1749 = vpack.c.bf16 %v1745, %v1744
    %v1750 = vpack.c.bf16 %v1493, %v1490
    %v1752 = vsel %vm555, %v1746, 0
    %v1755 = vsel %vm555, %v1747, 0
    %v1758 = vsel %vm555, %v1748, 0
    %v1761 = vsel %vm555, %v1749, 0
    %v1764 = vsel %vm568, %v1750, 0
    %1766 = vmatprep.subr.bf16.mxu0 0
    %1767 = vmatpush1.bf16.msra.mxu0 %v1764
    %1768 = vmatprep.subr.bf16.mxu0 0
    %1769 = vmatpush1.bf16.msra.mxu0 0
    %1770 = vmatprep.subr.bf16.mxu0 0
    %1771 = vmatpush1.bf16.msra.mxu0 0
    %1772 = vmatprep.subr.bf16.mxu0 0
    %1773 = vmatpush1.bf16.msra.mxu0 0
    %1774 = vmatprep.subr.bf16.mxu0 0
    %1775 = vmatpush1.bf16.msra.mxu0 0
    %1776 = vmatprep.subr.bf16.mxu0 0
    %1777 = vmatpush1.bf16.msra.mxu0 0
    %1778 = vmatprep.subr.bf16.mxu0 0
    %1779 = vmatpush1.bf16.msra.mxu0 0
    %1780 = vmatprep.subr.bf16.mxu0 0
    %1781 = vmatpush1.bf16.msra.mxu0 0
    %1782 = vmatprep.subr.bf16.mxu0 0
    %1783 = vmatpush1.bf16.msra.mxu0 0
    %1784 = vmatprep.subr.bf16.mxu0 0
    %1785 = vmatpush1.bf16.msra.mxu0 0
    %1786 = vmatprep.subr.bf16.mxu0 0
    %1787 = vmatpush1.bf16.msra.mxu0 0
    %1788 = vmatprep.subr.bf16.mxu0 0
    %1789 = vmatpush1.bf16.msra.mxu0 0
    %1790 = vmatprep.subr.bf16.mxu0 0
    %1791 = vmatpush1.bf16.msra.mxu0 0
    %1792 = vmatprep.subr.bf16.mxu0 0
    %1793 = vmatpush1.bf16.msra.mxu0 0
    %1794 = vmatprep.subr.bf16.mxu0 0
    %1795 = vmatpush1.bf16.msra.mxu0 0
    %1796 = vmatprep.subr.bf16.mxu0 0
    %1797 = vmatpush1.bf16.msra.mxu0 0
    %1798 = vmatprep.mubr.bf16.mxu0 0
    %1799 = vmatmul.mubr.bf16.gmra.mrb[0].mxu0 %v1752
    %v1800 = vpop.f32.mrb[0].mxu0
    %v1801 = vadd.f32 0.0, %v1800
    %v1802 = vpop.f32.mrb[0].mxu0
    %v1803 = vpop.f32.mrb[0].mxu0
    %v1804 = vadd.f32 0.0, %v1803
    %v1805 = vpop.f32.mrb[0].mxu0
    %1806 = vmatprep.mubr.bf16.mxu0 0
    %1807 = vmatmul.mubr.bf16.gmra.mrb[0].mxu0 %v1755
    %v1808 = vpop.f32.mrb[0].mxu0
    %v1809 = vadd.f32 0.0, %v1808
    %v1810 = vpop.f32.mrb[0].mxu0
    %v1811 = vpop.f32.mrb[0].mxu0
    %v1812 = vadd.f32 0.0, %v1811
    %v1813 = vpop.f32.mrb[0].mxu0
    %1814 = vmatprep.mubr.bf16.mxu0 0
    %1815 = vmatmul.mubr.bf16.gmra.mrb[0].mxu0 %v1758
    %v1816 = vpop.f32.mrb[0].mxu0
    %v1817 = vadd.f32 0.0, %v1816
    %v1818 = vpop.f32.mrb[0].mxu0
    %v1819 = vpop.f32.mrb[0].mxu0
    %v1820 = vadd.f32 0.0, %v1819
    %v1821 = vpop.f32.mrb[0].mxu0
    %1822 = vmatprep.mubr.bf16.mxu0 0
    %1823 = vmatmul.mubr.bf16.gmra.mrb[0].mxu0 %v1761
    %v1824 = vpop.f32.mrb[0].mxu0
    %v1825 = vadd.f32 0.0, %v1824
    %v1826 = vpop.f32.mrb[0].mxu0
    %v1827 = vpop.f32.mrb[0].mxu0
    %v1828 = vadd.f32 0.0, %v1827
    %v1829 = vpop.f32.mrb[0].mxu0
    %1830 = vdwg.mxu0
    %v1831 = vmul.f32 %v1801, %v311
    %v1832 = vmul.f32 %v1804, %v312
    %v1833 = vmul.f32 %v1809, %v313
    %v1834 = vmul.f32 %v1812, %v314
    %v1835 = vmul.f32 %v1817, %v315
    %v1836 = vmul.f32 %v1820, %v316
    %v1837 = vmul.f32 %v1825, %v317
    %v1838 = vmul.f32 %v1828, %v318
    %v1839 = vpack.c.bf16 %v1832, %v1831
    %v1840 = vpack.c.bf16 %v1834, %v1833
    %v1841 = vpack.c.bf16 %v1836, %v1835
    %v1842 = vpack.c.bf16 %v1838, %v1837
    %1843 = vmatprep.subr.bf16.mxu0 0
    %1844 = vmatpush1.bf16.msra.mxu0 %v1839
    %1845 = vmatprep.subr.bf16.mxu0 0
    %1846 = vmatpush1.bf16.msra.mxu0 %v1840
    %1847 = vmatprep.subr.bf16.mxu0 0
    %1848 = vmatpush1.bf16.msra.mxu0 %v1841
    %1849 = vmatprep.subr.bf16.mxu0 0
    %1850 = vmatpush1.bf16.msra.mxu0 %v1842
    %1851 = vmatprep.subr.bf16.mxu0 0
    %1852 = vmatpush1.bf16.msra.mxu0 0
    %1853 = vmatprep.subr.bf16.mxu0 0
    %1854 = vmatpush1.bf16.msra.mxu0 0
    %1855 = vmatprep.subr.bf16.mxu0 0
    %1856 = vmatpush1.bf16.msra.mxu0 0
    %1857 = vmatprep.subr.bf16.mxu0 0
    %1858 = vmatpush1.bf16.msra.mxu0 0
    %1859 = vmatprep.subr.bf16.mxu0 0
    %1860 = vmatpush1.bf16.msra.mxu0 0
    %1861 = vmatprep.subr.bf16.mxu0 0
    %1862 = vmatpush1.bf16.msra.mxu0 0
    %1863 = vmatprep.subr.bf16.mxu0 0
    %1864 = vmatpush1.bf16.msra.mxu0 0
    %1865 = vmatprep.subr.bf16.mxu0 0
    %1866 = vmatpush1.bf16.msra.mxu0 0
    %1867 = vmatprep.subr.bf16.mxu0 0
    %1868 = vmatpush1.bf16.msra.mxu0 0
    %1869 = vmatprep.subr.bf16.mxu0 0
    %1870 = vmatpush1.bf16.msra.mxu0 0
    %1871 = vmatprep.subr.bf16.mxu0 0
    %1872 = vmatpush1.bf16.msra.mxu0 0
    %1873 = vmatprep.subr.bf16.mxu0 0
    %1874 = vmatpush1.bf16.msra.mxu0 0
    %1875 = vmatprep.mubr.bf16.mxu0 0
    %1876 = vmatmul.mubr.bf16.gmra.mrb[0].mxu0 %v916
    %v1877 = vpop.f32.mrb[0].mxu0
    %v1878 = vadd.f32 0.0, %v1877
    %v1879 = vpop.f32.mrb[0].mxu0
    %v1880 = vpop.f32.mrb[0].mxu0
    %v1881 = vadd.f32 0.0, %v1880
    %v1882 = vpop.f32.mrb[0].mxu0
    %1883 = vdwg.mxu0
    %v1884 = vpack.c.bf16 %v1881, %v1878
    %v1885 = vld [vmem:[%s1 + $0x110] sm:$0xf]
    %v1886 = vld [vmem:[%s1 + $0x114] sm:$0xf]
    %v1887 = vld [vmem:[%s1 + $0x118] sm:$0xf]
    %v1888 = vld [vmem:[%s1 + $0x11c] sm:$0xf]
    %v1889 = vld [vmem:[%s3 + $0x25] sm:$0x1]
    %v1890 = vlaneseq
    %v1891 = vshrl.u32 %v1890, 7
    %v1892 = vsub.s32 0, %v1891
    %v1893 = vrot.slane %v1889, %v1892
    %v1898 = vunpack.c.l.b16 %v1885
    %v1899 = vunpack.c.l.b16 %v1886
    %v1900 = vunpack.c.l.b16 %v1887
    %v1901 = vunpack.c.l.b16 %v1888
    %v1902 = vpack.c.b16 %v1899, %v1898
    %v1903 = vpack.c.b16 %v1901, %v1900
    %v1907 = vsel %vm321, %v1884, 0
    %1909 = vmatprep.subr.bf16.mxu0 0
    %1910 = vmatpush1.bf16.msra.mxu0 %v1902
    %1911 = vmatprep.subr.bf16.mxu0 0
    %1912 = vmatpush1.bf16.msra.mxu0 %v1903
    %1913 = vmatprep.subr.bf16.mxu0 0
    %1914 = vmatpush1.bf16.msra.mxu0 0
    %1915 = vmatprep.subr.bf16.mxu0 0
    %1916 = vmatpush1.bf16.msra.mxu0 0
    %1917 = vmatprep.subr.bf16.mxu0 0
    %1918 = vmatpush1.bf16.msra.mxu0 0
    %1919 = vmatprep.subr.bf16.mxu0 0
    %1920 = vmatpush1.bf16.msra.mxu0 0
    %1921 = vmatprep.subr.bf16.mxu0 0
    %1922 = vmatpush1.bf16.msra.mxu0 0
    %1923 = vmatprep.subr.bf16.mxu0 0
    %1924 = vmatpush1.bf16.msra.mxu0 0
    %1925 = vmatprep.subr.bf16.mxu0 0
    %1926 = vmatpush1.bf16.msra.mxu0 0
    %1927 = vmatprep.subr.bf16.mxu0 0
    %1928 = vmatpush1.bf16.msra.mxu0 0
    %1929 = vmatprep.subr.bf16.mxu0 0
    %1930 = vmatpush1.bf16.msra.mxu0 0
    %1931 = vmatprep.subr.bf16.mxu0 0
    %1932 = vmatpush1.bf16.msra.mxu0 0
    %1933 = vmatprep.subr.bf16.mxu0 0
    %1934 = vmatpush1.bf16.msra.mxu0 0
    %1935 = vmatprep.subr.bf16.mxu0 0
    %1936 = vmatpush1.bf16.msra.mxu0 0
    %1937 = vmatprep.subr.bf16.mxu0 0
    %1938 = vmatpush1.bf16.msra.mxu0 0
    %1939 = vmatprep.subr.bf16.mxu0 0
    %1940 = vmatpush1.bf16.msra.mxu0 0
    %1941 = vmatprep.mubr.bf16.mxu0 0
    %1942 = vmatmul.mubr.bf16.gmra.mrb[0].mxu0 %v1907
    %v1943 = vpop.f32.mrb[0].mxu0
    %v1944 = vadd.f32 %v1893, %v1943
    %v1945 = vpop.f32.mrb[0].mxu0
    %v1946 = vpop.f32.mrb[0].mxu0
    %v1947 = vadd.f32 %v1893, %v1946
    %v1948 = vpop.f32.mrb[0].mxu0
    %1949 = vdwg.mxu0
    %v1950 = vadd.f32 %v1262, %v1944
    %v1951 = vadd.f32 %v1263, %v1947
    %v1952 = vld [vmem:[%s3 + $0x26] sm:$0x1]
    %v1953 = vld [vmem:[%s3 + $0x27] sm:$0x1]
    %v1954 = vsel %vm321, %v1950, 0.0
    %1955 = vadd.xlane.f32.xlu0 %v1954
    %v1956 = vpop.xlane.xlu0 %1955
    %v1957 = vsel %vm325, %v1951, 0.0
    %1958 = vadd.xlane.f32.xlu0 %v1957
    %v1959 = vpop.xlane.xlu0 %1958
    %v1960 = vmul.f32 %v1956, %v329
    %v1961 = vmul.f32 %v1959, %v329
    %v1962 = vsub.f32 %v1950, %v1960
    %v1963 = vsub.f32 %v1951, %v1961
    %v1964 = vmul.f32 %v1962, %v1962
    %v1965 = vmul.f32 %v1963, %v1963
    %v1966 = vsel %vm321, %v1964, 0.0
    %1967 = vadd.xlane.f32.xlu0 %v1966
    %v1968 = vpop.xlane.xlu0 %1967
    %v1969 = vsel %vm325, %v1965, 0.0
    %1970 = vadd.xlane.f32.xlu0 %v1969
    %v1971 = vpop.xlane.xlu0 %1970
    %v1972 = vmul.f32 %v1968, %v329
    %v1973 = vmul.f32 %v1971, %v329
    %v1974 = vadd.f32 %v1972, 1e-06
    %v1975 = vadd.f32 %v1973, 1e-06
    %v1976 = vrsqrt.pop %v1974
    %v1977 = vrsqrt.pop %v1975
    %v1978 = vmul.f32 %v1962, %v1976
    %v1979 = vmul.f32 %v1963, %v1977
    %v1980 = vlaneseq
    %v1981 = vshrl.u32 %v1980, 7
    %v1982 = vsub.s32 0, %v1981
    %v1983 = vrot.slane %v1952, %v1982
    %v1984 = vmul.f32 %v1978, %v1983
    %v1985 = vmul.f32 %v1979, %v1983
    %v1986 = vlaneseq
    %v1987 = vshrl.u32 %v1986, 7
    %v1988 = vsub.s32 0, %v1987
    %v1989 = vrot.slane %v1953, %v1988
    %v1990 = vadd.f32 %v1984, %v1989
    %v1991 = vadd.f32 %v1985, %v1989
    %v1992 = vpack.c.bf16 %v1991, %v1990
    %v1993 = vld [vmem:[%s2 + $0x10] sm:$0xf]
    %v1994 = vld [vmem:[%s2 + $0x14] sm:$0xf]
    %v1995 = vld [vmem:[%s2 + $0x18] sm:$0xf]
    %v1996 = vld [vmem:[%s2 + $0x1c] sm:$0xf]
    %v1997 = vld [vmem:[%s4 + $0x1] sm:$0x1]
    %v1998 = vlaneseq
    %v1999 = vshrl.u32 %v1998, 7
    %v2000 = vsub.s32 0, %v1999
    %v2001 = vrot.slane %v1997, %v2000
    %v2006 = vunpack.c.l.b16 %v1993
    %v2007 = vunpack.c.l.b16 %v1994
    %v2008 = vunpack.c.l.b16 %v1995
    %v2009 = vunpack.c.l.b16 %v1996
    %v2010 = vpack.c.b16 %v2007, %v2006
    %v2011 = vpack.c.b16 %v2009, %v2008
    %v2015 = vsel %vm321, %v1992, 0
    %2017 = vmatprep.subr.bf16.mxu0 0
    %2018 = vmatpush1.bf16.msra.mxu0 %v2010
    %2019 = vmatprep.subr.bf16.mxu0 0
    %2020 = vmatpush1.bf16.msra.mxu0 %v2011
    %2021 = vmatprep.subr.bf16.mxu0 0
    %2022 = vmatpush1.bf16.msra.mxu0 0
    %2023 = vmatprep.subr.bf16.mxu0 0
    %2024 = vmatpush1.bf16.msra.mxu0 0
    %2025 = vmatprep.subr.bf16.mxu0 0
    %2026 = vmatpush1.bf16.msra.mxu0 0
    %2027 = vmatprep.subr.bf16.mxu0 0
    %2028 = vmatpush1.bf16.msra.mxu0 0
    %2029 = vmatprep.subr.bf16.mxu0 0
    %2030 = vmatpush1.bf16.msra.mxu0 0
    %2031 = vmatprep.subr.bf16.mxu0 0
    %2032 = vmatpush1.bf16.msra.mxu0 0
    %2033 = vmatprep.subr.bf16.mxu0 0
    %2034 = vmatpush1.bf16.msra.mxu0 0
    %2035 = vmatprep.subr.bf16.mxu0 0
    %2036 = vmatpush1.bf16.msra.mxu0 0
    %2037 = vmatprep.subr.bf16.mxu0 0
    %2038 = vmatpush1.bf16.msra.mxu0 0
    %2039 = vmatprep.subr.bf16.mxu0 0
    %2040 = vmatpush1.bf16.msra.mxu0 0
    %2041 = vmatprep.subr.bf16.mxu0 0
    %2042 = vmatpush1.bf16.msra.mxu0 0
    %2043 = vmatprep.subr.bf16.mxu0 0
    %2044 = vmatpush1.bf16.msra.mxu0 0
    %2045 = vmatprep.subr.bf16.mxu0 0
    %2046 = vmatpush1.bf16.msra.mxu0 0
    %2047 = vmatprep.subr.bf16.mxu0 0
    %2048 = vmatpush1.bf16.msra.mxu0 0
    %2049 = vmatprep.mubr.bf16.mxu0 0
    %2050 = vmatmul.mubr.bf16.gmra.mrb[0].mxu0 %v2015
    %v2051 = vpop.f32.mrb[0].mxu0
    %v2052 = vadd.f32 %v2001, %v2051
    %v2053 = vpop.f32.mrb[0].mxu0
    %v2054 = vpop.f32.mrb[0].mxu0
    %v2055 = vadd.f32 %v2001, %v2054
    %v2056 = vpop.f32.mrb[0].mxu0
    %2057 = vdwg.mxu0
    %v2058 = vmul.f32 %v2052, 0.5
    %v2059 = vmul.f32 %v2055, 0.5
    %v2060 = vmul.f32 %v2052, 0.044715
    %v2061 = vmul.f32 %v2055, 0.044715
    %v2062 = vmul.f32 %v2060, %v2052
    %v2063 = vmul.f32 %v2061, %v2055
    %v2064 = vmul.f32 %v2062, %v2052
    %v2065 = vmul.f32 %v2063, %v2055
    %v2066 = vadd.f32 %v2052, %v2064
    %v2067 = vadd.f32 %v2055, %v2065
    %v2068 = vmul.f32 %v2066, 0.7978846
    %v2069 = vmul.f32 %v2067, 0.7978846
    %v2070 = vtanh.pop %v2068
    %v2071 = vtanh.pop %v2069
    %v2072 = vadd.f32 %v2070, 1.0
    %v2073 = vadd.f32 %v2071, 1.0
    %v2074 = vmul.f32 %v2058, %v2072
    %v2075 = vmul.f32 %v2059, %v2073
    %v2076 = vpack.c.bf16 %v2075, %v2074
    %v2077 = vld [vmem:[%s1 + $0x120] sm:$0xf]
    %v2078 = vld [vmem:[%s1 + $0x124] sm:$0xf]
    %v2079 = vld [vmem:[%s1 + $0x128] sm:$0xf]
    %v2080 = vld [vmem:[%s1 + $0x12c] sm:$0xf]
    %v2081 = vld [vmem:[%s1 + $0x130] sm:$0xf]
    %v2082 = vld [vmem:[%s1 + $0x134] sm:$0xf]
    %v2083 = vld [vmem:[%s1 + $0x138] sm:$0xf]
    %v2084 = vld [vmem:[%s1 + $0x13c] sm:$0xf]
    %v2085 = vld [vmem:[%s1 + $0x140] sm:$0xf]
    %v2086 = vld [vmem:[%s1 + $0x144] sm:$0xf]
    %v2087 = vld [vmem:[%s1 + $0x148] sm:$0xf]
    %v2088 = vld [vmem:[%s1 + $0x14c] sm:$0xf]
    %v2089 = vld [vmem:[%s1 + $0x150] sm:$0xf]
    %v2090 = vld [vmem:[%s1 + $0x154] sm:$0xf]
    %v2091 = vld [vmem:[%s1 + $0x158] sm:$0xf]
    %v2092 = vld [vmem:[%s1 + $0x15c] sm:$0xf]
    %v2093 = vld [vmem:[%s3 + $0x28] sm:$0x1]
    %v2094 = vlaneseq
    %v2095 = vshrl.u32 %v2094, 7
    %v2096 = vsub.s32 0, %v2095
    %v2097 = vrot.slane %v2093, %v2096
    %v2114 = vunpack.c.l.b16 %v2077
    %v2115 = vunpack.c.l.b16 %v2078
    %v2116 = vunpack.c.l.b16 %v2079
    %v2117 = vunpack.c.l.b16 %v2080
    %v2118 = vunpack.c.l.b16 %v2081
    %v2119 = vunpack.c.l.b16 %v2082
    %v2120 = vunpack.c.l.b16 %v2083
    %v2121 = vunpack.c.l.b16 %v2084
    %v2122 = vunpack.c.l.b16 %v2085
    %v2123 = vunpack.c.l.b16 %v2086
    %v2124 = vunpack.c.l.b16 %v2087
    %v2125 = vunpack.c.l.b16 %v2088
    %v2126 = vunpack.c.l.b16 %v2089
    %v2127 = vunpack.c.l.b16 %v2090
    %v2128 = vunpack.c.l.b16 %v2091
    %v2129 = vunpack.c.l.b16 %v2092
    %v2130 = vpack.c.b16 %v2115, %v2114
    %v2131 = vpack.c.b16 %v2117, %v2116
    %v2132 = vpack.c.b16 %v2119, %v2118
    %v2133 = vpack.c.b16 %v2121, %v2120
    %v2134 = vpack.c.b16 %v2123, %v2122
    %v2135 = vpack.c.b16 %v2125, %v2124
    %v2136 = vpack.c.b16 %v2127, %v2126
    %v2137 = vpack.c.b16 %v2129, %v2128
    %2146 = vmatprep.subr.bf16.mxu0 0
    %2147 = vmatpush1.bf16.msra.mxu0 %v2130
    %2148 = vmatprep.subr.bf16.mxu0 0
    %2149 = vmatpush1.bf16.msra.mxu0 %v2131
    %2150 = vmatprep.subr.bf16.mxu0 0
    %2151 = vmatpush1.bf16.msra.mxu0 %v2132
    %2152 = vmatprep.subr.bf16.mxu0 0
    %2153 = vmatpush1.bf16.msra.mxu0 %v2133
    %2154 = vmatprep.subr.bf16.mxu0 0
    %2155 = vmatpush1.bf16.msra.mxu0 %v2134
    %2156 = vmatprep.subr.bf16.mxu0 0
    %2157 = vmatpush1.bf16.msra.mxu0 %v2135
    %2158 = vmatprep.subr.bf16.mxu0 0
    %2159 = vmatpush1.bf16.msra.mxu0 %v2136
    %2160 = vmatprep.subr.bf16.mxu0 0
    %2161 = vmatpush1.bf16.msra.mxu0 %v2137
    %2162 = vmatprep.subr.bf16.mxu0 0
    %2163 = vmatpush1.bf16.msra.mxu0 0
    %2164 = vmatprep.subr.bf16.mxu0 0
    %2165 = vmatpush1.bf16.msra.mxu0 0
    %2166 = vmatprep.subr.bf16.mxu0 0
    %2167 = vmatpush1.bf16.msra.mxu0 0
    %2168 = vmatprep.subr.bf16.mxu0 0
    %2169 = vmatpush1.bf16.msra.mxu0 0
    %2170 = vmatprep.subr.bf16.mxu0 0
    %2171 = vmatpush1.bf16.msra.mxu0 0
    %2172 = vmatprep.subr.bf16.mxu0 0
    %2173 = vmatpush1.bf16.msra.mxu0 0
    %2174 = vmatprep.subr.bf16.mxu0 0
    %2175 = vmatpush1.bf16.msra.mxu0 0
    %2176 = vmatprep.subr.bf16.mxu0 0
    %2177 = vmatpush1.bf16.msra.mxu0 0
    %2178 = vmatprep.mubr.bf16.mxu0 0
    %2179 = vmatmul.mubr.bf16.gmra.mrb[0].mxu0 %v2076
    %v2180 = vpop.f32.mrb[0].mxu0
    %v2181 = vpop.f32.mrb[0].mxu0
    %v2182 = vpop.f32.mrb[0].mxu0
    %v2183 = vadd.f32 %v2097, %v2182
    %v2184 = vpop.f32.mrb[0].mxu0
    %2185 = vdwg.mxu0
    %v2186 = vadd.f32 %v1951, %v2183
    %v2187 = vld [vmem:[%s3 + $0xa] sm:$0x1]
    %v2188 = vld [vmem:[%s3 + $0xb] sm:$0x1]
    %v2189 = vsel %vm325, %v2186, 0.0
    %2190 = vadd.xlane.f32.xlu0 %v2189
    %v2191 = vpop.xlane.xlu0 %2190
    %v2192 = vmul.f32 %v2191, %v329
    %v2193 = vsub.f32 %v2186, %v2192
    %v2194 = vmul.f32 %v2193, %v2193
    %v2195 = vsel %vm325, %v2194, 0.0
    %2196 = vadd.xlane.f32.xlu0 %v2195
    %v2197 = vpop.xlane.xlu0 %2196
    %v2198 = vmul.f32 %v2197, %v329
    %v2199 = vadd.f32 %v2198, 1e-06
    %v2200 = vrsqrt.pop %v2199
    %v2201 = vmul.f32 %v2193, %v2200
    %v2202 = vlaneseq
    %v2203 = vshrl.u32 %v2202, 7
    %v2204 = vsub.s32 0, %v2203
    %v2205 = vrot.slane %v2187, %v2204
    %v2206 = vmul.f32 %v2201, %v2205
    %v2207 = vlaneseq
    %v2208 = vshrl.u32 %v2207, 7
    %v2209 = vsub.s32 0, %v2208
    %v2210 = vrot.slane %v2188, %v2209
    %v2211 = vadd.f32 %v2206, %v2210
    %2212 = vst.msk [vmem:[#allocation2] sm:$0x3] %vm325, %v2211
    // Predicated region
    $region22: #{dino_vit_forward.1} parent=1 // pred_check
      _
    $region23: #{dino_vit_forward.1} parent=1 // pred_check_branch
      %2214 = sbr.rel (0) target = $region25
    $region24: #{dino_vit_forward.1} parent=1 // pred_region
      %s2216 = ssub.s32 32, 32
      %2217 = vsyncadd [#allocation3], %s2216
      %s2219 = sshll.u32 [#allocation2], 4
      %s2220 = int_to_ptr.vmem [resolvable:$true] %s2219
      %2222 = dma.vmem_to_hbm [thread:$0]  %s2220, 32, %s5, [#allocation3]
    $region25: #{dino_vit_forward.1} parent=1 // pred_fallthru
      _
    // Predicated region
    $region26: #{dino_vit_forward.1} parent=1 // pred_check
      _
    $region27: #{dino_vit_forward.1} parent=1 // pred_check_branch
      %2224 = sbr.rel (0) target = $region29
    $region28: #{dino_vit_forward.1} parent=1 // pred_region
      %2225 = dma.done [#allocation3], 32
    $region29: #{dino_vit_forward.1} parent=1 // pred_fallthru
      _
    %2226 = vsyncpa [#allocation3], 1

</llo_original>
